<compile_context>
chip_gen: v5e
topology: v5e:2x2
jax: 0.10.0
libtpu: 0.0.40
codegen_flags: <defaults>
</compile_context>

<pallas_src>
import jax
import jax.numpy as jnp
from jax import lax
from jax.experimental import pallas as pl
from jax.experimental.pallas import tpu as pltpu


def _se_block_kernel(xsq_ref, w44_ref, x_ref, w45_ref, params_ref, o_ref):
    C_mid = w44_ref.shape[0]   # 576
    C_out = o_ref.shape[0]     # 96

    # params layout (rows): [0:C_mid) = conv44 bias, then gamma, then beta.
    # Static, sublane-aligned slices (576 and 672 are multiples of 8).
    b44 = params_ref[0:C_mid, :]                                  # [576, 1]
    gamma = params_ref[C_mid:C_mid + C_out, :]                    # [96, 1]
    beta = params_ref[C_mid + C_out:C_mid + 2 * C_out, :]         # [96, 1]

    # --- conv2d44: 1x1 conv on 1x1 spatial == matvec ------------------------
    # [576,144] @ [144,1] -> [576,1]   (raw weight orientation, no transpose)
    s = jnp.dot(w44_ref[...], xsq_ref[...],
                preferred_element_type=jnp.float32) + b44          # [576, 1]

    # --- Hardsigmoid: relu6(x + 3) / 6 --------------------------------------
    hs = jnp.clip(s * (1.0 / 6.0) + 0.5, 0.0, 1.0)                 # [576, 1]

    # --- SE gate: broadcast multiply along the spatial (lane) axis ----------
    y = x_ref[...] * hs                                            # [576, 49]

    # --- conv2d45: 1x1 conv == matmul, no bias ------------------------------
    # [96,576] @ [576,49] -> [96,49]
    z = jnp.dot(w45_ref[...], y, preferred_element_type=jnp.float32)

    # --- BatchNorm2d (training mode: biased batch stats over N*H*W) ---------
    # Single fused pass over z: var = E[z^2] - mean^2 (all f32, 49 samples).
    eps = 1e-3
    inv_n = 1.0 / z.shape[1]
    mean = jnp.sum(z, axis=1, keepdims=True) * inv_n               # [96, 1]
    ex2 = jnp.sum(z * z, axis=1, keepdims=True) * inv_n            # [96, 1]
    var = ex2 - mean * mean
    scale = lax.rsqrt(var + eps) * gamma                           # [96, 1]
    o_ref[...] = (z - mean) * scale + beta                         # [96, 49]


def se_block(x127, x124, w44, b44, w45, gamma, beta):
    """x127: [1,144,1,1], x124: [1,576,7,7]  (NCHW, float32) -> [1,96,7,7]."""
    N, C_in, H, W = x124.shape
    assert N == 1
    C_sq = x127.shape[1]     # 144
    C_mid = w44.shape[0]     # 576
    C_out = w45.shape[0]     # 96
    HW = H * W               # 49

    # Pure reshapes only (row-major metadata changes) — zero transposes.
    x_sq = x127.reshape(C_sq, 1).astype(jnp.float32)               # [144, 1]
    x_sp = x124.reshape(C_in, HW).astype(jnp.float32)              # [576, 49]
    w44_m = w44.reshape(C_mid, C_sq)                               # [576, 144]
    w45_m = w45.reshape(C_out, C_in)                               # [96, 576]
    # Fuse the three tiny 1-D params into one operand -> one DMA.
    params = jnp.concatenate([b44, gamma, beta]).reshape(-1, 1)    # [768, 1]

    flops = 2 * C_sq * C_mid + 2 * C_in * HW * C_out + 8 * C_out * HW
    bytes_accessed = 4 * (x_sq.size + x_sp.size + w44_m.size + w45_m.size
                          + params.size + C_out * HW)

    out_flat = pl.pallas_call(
        _se_block_kernel,
        out_shape=jax.ShapeDtypeStruct((C_out, HW), jnp.float32),
        # All operands are tiny; keep them as whole-array VMEM blocks (grid = ()).
        in_specs=[
            pl.BlockSpec(memory_space=pltpu.MemorySpace.VMEM),  # x_sq   [144,1]
            pl.BlockSpec(memory_space=pltpu.MemorySpace.VMEM),  # w44    [576,144]
            pl.BlockSpec(memory_space=pltpu.MemorySpace.VMEM),  # x_sp   [576,49]
            pl.BlockSpec(memory_space=pltpu.MemorySpace.VMEM),  # w45    [96,576]
            pl.BlockSpec(memory_space=pltpu.MemorySpace.VMEM),  # params [768,1]
        ],
        out_specs=pl.BlockSpec(memory_space=pltpu.MemorySpace.VMEM),
        cost_estimate=pl.CostEstimate(flops=flops,
                                      transcendentals=C_out,
                                      bytes_accessed=bytes_accessed),
    )(x_sq, w44_m, x_sp, w45_m, params)

    # [96, 49] -> [1, 96, 7, 7]   (pure reshape, free)
    return out_flat.reshape(1, C_out, H, W)


def _reference(x127, x124, w44, b44, w45, gamma, beta):
    """Pure-JAX reference mirroring the PyTorch forward (training-mode BN)."""
    s = jnp.einsum('oc,nchw->nohw', w44.reshape(576, 144), x127) \
        + b44.reshape(1, -1, 1, 1)                                  # [1,576,1,1]
    hs = jnp.clip((s + 3.0) / 6.0, 0.0, 1.0)                        # Hardsigmoid
    y = hs * x124                                                   # [1,576,7,7]
    z = jnp.einsum('oc,nchw->nohw', w45.reshape(96, 576), y)        # [1,96,7,7]
    mean = jnp.mean(z, axis=(0, 2, 3), keepdims=True)
    var = jnp.mean((z - mean) ** 2, axis=(0, 2, 3), keepdims=True)
    z_hat = (z - mean) / jnp.sqrt(var + 1e-3)
    return z_hat * gamma.reshape(1, -1, 1, 1) + beta.reshape(1, -1, 1, 1)


if __name__ == "__main__":
    key = jax.random.PRNGKey(0)
    k1, k2, k3, k4, k5 = jax.random.split(key, 5)

    # inputs (shapes fixed by the module's channel counts)
    x124 = jax.random.normal(k1, (1, 576, 7, 7), dtype=jnp.float32)
    x127 = jax.random.normal(k2, (1, 144, 1, 1), dtype=jnp.float32)

    # deterministic parameter init (synthetic, not a checkpoint)
    w44 = 0.05 * jax.random.normal(k3, (576, 144, 1, 1), dtype=jnp.float32)
    b44 = 0.05 * jax.random.normal(k4, (576,), dtype=jnp.float32)
    w45 = 0.05 * jax.random.normal(k5, (96, 576, 1, 1), dtype=jnp.float32)
    gamma = jnp.ones((96,), dtype=jnp.float32)     # BatchNorm2d affine init
    beta = jnp.zeros((96,), dtype=jnp.float32)

    out = se_block(x127, x124, w44, b44, w45, gamma, beta)
    out = jax.block_until_ready(out)

    ref = _reference(x127, x124, w44, b44, w45, gamma, beta)
    assert out.shape == (1, 96, 7, 7)
    assert jnp.allclose(out, ref, atol=2e-4, rtol=2e-4), \
        f"max diff {jnp.max(jnp.abs(out - ref))}"

    print("KERNEL_OK")
</pallas_src>

<mosaic_0001>
module attributes {stable_mosaic.version = 11 : i64} {
  func.func @_se_block_kernel(%arg0: memref<144x1xf32, #tpu.memory_space<vmem>>, %arg1: memref<576x144xf32, #tpu.memory_space<vmem>>, %arg2: memref<576x49xf32, #tpu.memory_space<vmem>>, %arg3: memref<96x576xf32, #tpu.memory_space<vmem>>, %arg4: memref<768x1xf32, #tpu.memory_space<vmem>>, %arg5: memref<96x49xf32, #tpu.memory_space<vmem>>) attributes {dimension_semantics = [], scalar_prefetch = 0 : i64, scratch_operands = 0 : i64, tpu.core_type = #tpu.core_type<tc>} {
    %c0 = arith.constant 0 : index
    %c0_0 = arith.constant 0 : index
    %0 = vector.load %arg4[%c0, %c0_0] : memref<768x1xf32, #tpu.memory_space<vmem>>, vector<576x1xf32>
    %c576 = arith.constant 576 : index
    %c0_1 = arith.constant 0 : index
    %1 = vector.load %arg4[%c576, %c0_1] : memref<768x1xf32, #tpu.memory_space<vmem>>, vector<96x1xf32>
    %c672 = arith.constant 672 : index
    %c0_2 = arith.constant 0 : index
    %2 = vector.load %arg4[%c672, %c0_2] : memref<768x1xf32, #tpu.memory_space<vmem>>, vector<96x1xf32>
    %c0_3 = arith.constant 0 : index
    %c0_4 = arith.constant 0 : index
    %3 = vector.load %arg1[%c0_3, %c0_4] : memref<576x144xf32, #tpu.memory_space<vmem>>, vector<576x144xf32>
    %c0_5 = arith.constant 0 : index
    %c0_6 = arith.constant 0 : index
    %4 = vector.load %arg0[%c0_5, %c0_6] : memref<144x1xf32, #tpu.memory_space<vmem>>, vector<144x1xf32>
    %cst = arith.constant dense<0.000000e+00> : vector<576x1xf32>
    %5 = tpu.matmul %3, %4, %cst {dimension_numbers = #tpu.dot_dimension_numbers<[1], [0], [0], [1], [0, 0, 1, 1], [], []>} : vector<576x144xf32>, vector<144x1xf32>, vector<576x1xf32> -> vector<576x1xf32>
    %6 = arith.addf %5, %0 : vector<576x1xf32>
    %cst_7 = arith.constant 0.166666672 : f32
    %7 = vector.broadcast %cst_7 : f32 to vector<576x1xf32>
    %8 = arith.mulf %6, %7 : vector<576x1xf32>
    %cst_8 = arith.constant 5.000000e-01 : f32
    %9 = vector.broadcast %cst_8 : f32 to vector<576x1xf32>
    %10 = arith.addf %8, %9 : vector<576x1xf32>
    %cst_9 = arith.constant 0.000000e+00 : f32
    %cst_10 = arith.constant 1.000000e+00 : f32
    %11 = vector.broadcast %cst_9 : f32 to vector<576x1xf32>
    %12 = arith.maximumf %11, %10 : vector<576x1xf32>
    %13 = vector.broadcast %cst_10 : f32 to vector<576x1xf32>
    %14 = arith.minimumf %13, %12 : vector<576x1xf32>
    %c0_11 = arith.constant 0 : index
    %c0_12 = arith.constant 0 : index
    %15 = vector.load %arg2[%c0_11, %c0_12] : memref<576x49xf32, #tpu.memory_space<vmem>>, vector<576x49xf32>
    %16 = vector.broadcast %14 : vector<576x1xf32> to vector<576x49xf32>
    %17 = arith.mulf %15, %16 : vector<576x49xf32>
    %c0_13 = arith.constant 0 : index
    %c0_14 = arith.constant 0 : index
    %18 = vector.load %arg3[%c0_13, %c0_14] : memref<96x576xf32, #tpu.memory_space<vmem>>, vector<96x576xf32>
    %cst_15 = arith.constant dense<0.000000e+00> : vector<96x49xf32>
    %19 = tpu.matmul %18, %17, %cst_15 {dimension_numbers = #tpu.dot_dimension_numbers<[1], [0], [0], [1], [0, 0, 1, 1], [], []>} : vector<96x576xf32>, vector<576x49xf32>, vector<96x49xf32> -> vector<96x49xf32>
    %cst_16 = arith.constant dense<0.000000e+00> : vector<96xf32>
    %20 = vector.multi_reduction <add>, %19, %cst_16 [1] : vector<96x49xf32> to vector<96xf32>
    %21 = vector.shape_cast %20 : vector<96xf32> to vector<96x1xf32>
    %cst_17 = arith.constant 0.0204081628 : f32
    %22 = vector.broadcast %cst_17 : f32 to vector<96x1xf32>
    %23 = arith.mulf %21, %22 : vector<96x1xf32>
    %24 = arith.mulf %19, %19 : vector<96x49xf32>
    %cst_18 = arith.constant dense<0.000000e+00> : vector<96xf32>
    %25 = vector.multi_reduction <add>, %24, %cst_18 [1] : vector<96x49xf32> to vector<96xf32>
    %26 = vector.shape_cast %25 : vector<96xf32> to vector<96x1xf32>
    %cst_19 = arith.constant 0.0204081628 : f32
    %27 = vector.broadcast %cst_19 : f32 to vector<96x1xf32>
    %28 = arith.mulf %26, %27 : vector<96x1xf32>
    %29 = arith.mulf %23, %23 : vector<96x1xf32>
    %30 = arith.subf %28, %29 : vector<96x1xf32>
    %cst_20 = arith.constant 1.000000e-03 : f32
    %31 = vector.broadcast %cst_20 : f32 to vector<96x1xf32>
    %32 = arith.addf %30, %31 : vector<96x1xf32>
    %33 = math.rsqrt %32 : vector<96x1xf32>
    %34 = arith.mulf %33, %1 : vector<96x1xf32>
    %35 = vector.broadcast %23 : vector<96x1xf32> to vector<96x49xf32>
    %36 = arith.subf %19, %35 : vector<96x49xf32>
    %37 = vector.broadcast %34 : vector<96x1xf32> to vector<96x49xf32>
    %38 = arith.mulf %36, %37 : vector<96x49xf32>
    %39 = vector.broadcast %2 : vector<96x1xf32> to vector<96x49xf32>
    %40 = arith.addf %38, %39 : vector<96x49xf32>
    %c0_21 = arith.constant 0 : index
    %c0_22 = arith.constant 0 : index
    %41 = vector.load %arg5[%c0_21, %c0_22] : memref<96x49xf32, #tpu.memory_space<vmem>>, vector<96x49xf32>
    tpu.vector_store %arg5[%c0_21, %c0_22], %40 {strides = array<i32>} : memref<96x49xf32, #tpu.memory_space<vmem>>, vector<96x49xf32>,
    return
  }
}

</mosaic_0001>

<llo_original>
// kernel: tpu_custom_call.1
$region0: #{tpu_custom_call.1}
  #allocation0 [shape = 'u32[]', space=smem, size = 0x4, offset = 0x4, fixed_abs, tag = 'smem constant byte address 0x4 - core index']
  #allocation1 [shape = 'u32[72,128]{1,0:T(1,128)}', space=vmem, size = 0x9000, scoped, tag = 'internal scratch']
  %s0 = inlined_call_operand.vmem [shape: f32[144,1], index: 0, kind: input, shape index: {}]
  %s1 = inlined_call_operand.vmem [shape: f32[576,144], index: 1, kind: input, shape index: {}]
  %s2 = inlined_call_operand.vmem [shape: f32[576,49], index: 2, kind: input, shape index: {}]
  %s3 = inlined_call_operand.vmem [shape: f32[96,576], index: 3, kind: input, shape index: {}]
  %s4 = inlined_call_operand.vmem [shape: f32[768,1], index: 4, kind: input, shape index: {}]
  %s5 = inlined_call_operand.vmem [shape: f32[96,49], index: 5, kind: output, shape index: {}]
  %s6 = sld [smem:[#allocation0]]
  $region30: #{tpu_custom_call.1} parent=0
    _
  %s8 = ssub.s32 1, %s6
  %s9 = scalar_select 0, %s8, %s6
  // Predicated region
  $region2: #{tpu_custom_call.1} parent=0 // pred_check
    _
  $region3: #{tpu_custom_call.1} parent=0 // pred_check_branch
    %11 = sbr.rel (0) target = $region5
  $region4: #{tpu_custom_call.1} parent=0 // pred_region
    _
  $region5: #{tpu_custom_call.1} parent=0 // pred_fallthru
    _
  // Predicated region
  $region6: #{tpu_custom_call.1} parent=0 // pred_check
    _
  $region7: #{tpu_custom_call.1} parent=0 // pred_check_branch
    %13 = sbr.rel (0) target = $region9
  $region8: #{tpu_custom_call.1} parent=0 // pred_region
    _
  $region9: #{tpu_custom_call.1} parent=0 // pred_fallthru
    _
  // Predicated region
  $region10: #{tpu_custom_call.1} parent=0 // pred_check
    _
  $region11: #{tpu_custom_call.1} parent=0 // pred_check_branch
    %15 = sbr.rel (0) target = $region13
  $region12: #{tpu_custom_call.1} parent=0 // pred_region
    _
  $region13: #{tpu_custom_call.1} parent=0 // pred_fallthru
    _
  // Predicated region
  $region14: #{tpu_custom_call.1} parent=0 // pred_check
    _
  $region15: #{tpu_custom_call.1} parent=0 // pred_check_branch
    %17 = sbr.rel (0) target = $region17
  $region16: #{tpu_custom_call.1} parent=0 // pred_region
    _
  $region17: #{tpu_custom_call.1} parent=0 // pred_fallthru
    _
  // Predicated region
  $region18: #{tpu_custom_call.1} parent=0 // pred_check
    _
  $region19: #{tpu_custom_call.1} parent=0 // pred_check_branch
    %19 = sbr.rel (0) target = $region21
  $region20: #{tpu_custom_call.1} parent=0 // pred_region
    _
  $region21: #{tpu_custom_call.1} parent=0 // pred_fallthru
    _
  %v20 = vld [vmem:[%s4] sm:$0xff]
  %v21 = vld [vmem:[%s4 + $0x8] sm:$0xff]
  %v22 = vld [vmem:[%s4 + $0x10] sm:$0xff]
  %v23 = vld [vmem:[%s4 + $0x18] sm:$0xff]
  %v24 = vld [vmem:[%s4 + $0x20] sm:$0xff]
  %v25 = vld [vmem:[%s4 + $0x28] sm:$0xff]
  %v26 = vld [vmem:[%s4 + $0x30] sm:$0xff]
  %v27 = vld [vmem:[%s4 + $0x38] sm:$0xff]
  %v28 = vld [vmem:[%s4 + $0x40] sm:$0xff]
  %v29 = vld [vmem:[%s4 + $0x48] sm:$0xff]
  %v30 = vld [vmem:[%s4 + $0x50] sm:$0xff]
  %v31 = vld [vmem:[%s4 + $0x58] sm:$0xff]
  %v32 = vld [vmem:[%s4 + $0x60] sm:$0xff]
  %v33 = vld [vmem:[%s4 + $0x68] sm:$0xff]
  %v34 = vld [vmem:[%s4 + $0x70] sm:$0xff]
  %v35 = vld [vmem:[%s4 + $0x78] sm:$0xff]
  %v36 = vld [vmem:[%s4 + $0x80] sm:$0xff]
  %v37 = vld [vmem:[%s4 + $0x88] sm:$0xff]
  %v38 = vld [vmem:[%s4 + $0x90] sm:$0xff]
  %v39 = vld [vmem:[%s4 + $0x98] sm:$0xff]
  %v40 = vld [vmem:[%s4 + $0xa0] sm:$0xff]
  %v41 = vld [vmem:[%s4 + $0xa8] sm:$0xff]
  %v42 = vld [vmem:[%s4 + $0xb0] sm:$0xff]
  %v43 = vld [vmem:[%s4 + $0xb8] sm:$0xff]
  %v44 = vld [vmem:[%s4 + $0xc0] sm:$0xff]
  %v45 = vld [vmem:[%s4 + $0xc8] sm:$0xff]
  %v46 = vld [vmem:[%s4 + $0xd0] sm:$0xff]
  %v47 = vld [vmem:[%s4 + $0xd8] sm:$0xff]
  %v48 = vld [vmem:[%s4 + $0xe0] sm:$0xff]
  %v49 = vld [vmem:[%s4 + $0xe8] sm:$0xff]
  %v50 = vld [vmem:[%s4 + $0xf0] sm:$0xff]
  %v51 = vld [vmem:[%s4 + $0xf8] sm:$0xff]
  %v52 = vld [vmem:[%s4 + $0x100] sm:$0xff]
  %v53 = vld [vmem:[%s4 + $0x108] sm:$0xff]
  %v54 = vld [vmem:[%s4 + $0x110] sm:$0xff]
  %v55 = vld [vmem:[%s4 + $0x118] sm:$0xff]
  %v56 = vld [vmem:[%s4 + $0x120] sm:$0xff]
  %v57 = vld [vmem:[%s4 + $0x128] sm:$0xff]
  %v58 = vld [vmem:[%s4 + $0x130] sm:$0xff]
  %v59 = vld [vmem:[%s4 + $0x138] sm:$0xff]
  %v60 = vld [vmem:[%s4 + $0x140] sm:$0xff]
  %v61 = vld [vmem:[%s4 + $0x148] sm:$0xff]
  %v62 = vld [vmem:[%s4 + $0x150] sm:$0xff]
  %v63 = vld [vmem:[%s4 + $0x158] sm:$0xff]
  %v64 = vld [vmem:[%s4 + $0x160] sm:$0xff]
  %v65 = vld [vmem:[%s4 + $0x168] sm:$0xff]
  %v66 = vld [vmem:[%s4 + $0x170] sm:$0xff]
  %v67 = vld [vmem:[%s4 + $0x178] sm:$0xff]
  %v68 = vld [vmem:[%s4 + $0x180] sm:$0xff]
  %v69 = vld [vmem:[%s4 + $0x188] sm:$0xff]
  %v70 = vld [vmem:[%s4 + $0x190] sm:$0xff]
  %v71 = vld [vmem:[%s4 + $0x198] sm:$0xff]
  %v72 = vld [vmem:[%s4 + $0x1a0] sm:$0xff]
  %v73 = vld [vmem:[%s4 + $0x1a8] sm:$0xff]
  %v74 = vld [vmem:[%s4 + $0x1b0] sm:$0xff]
  %v75 = vld [vmem:[%s4 + $0x1b8] sm:$0xff]
  %v76 = vld [vmem:[%s4 + $0x1c0] sm:$0xff]
  %v77 = vld [vmem:[%s4 + $0x1c8] sm:$0xff]
  %v78 = vld [vmem:[%s4 + $0x1d0] sm:$0xff]
  %v79 = vld [vmem:[%s4 + $0x1d8] sm:$0xff]
  %v80 = vld [vmem:[%s4 + $0x1e0] sm:$0xff]
  %v81 = vld [vmem:[%s4 + $0x1e8] sm:$0xff]
  %v82 = vld [vmem:[%s4 + $0x1f0] sm:$0xff]
  %v83 = vld [vmem:[%s4 + $0x1f8] sm:$0xff]
  %v84 = vld [vmem:[%s4 + $0x200] sm:$0xff]
  %v85 = vld [vmem:[%s4 + $0x208] sm:$0xff]
  %v86 = vld [vmem:[%s4 + $0x210] sm:$0xff]
  %v87 = vld [vmem:[%s4 + $0x218] sm:$0xff]
  %v88 = vld [vmem:[%s4 + $0x220] sm:$0xff]
  %v89 = vld [vmem:[%s4 + $0x228] sm:$0xff]
  %v90 = vld [vmem:[%s4 + $0x230] sm:$0xff]
  %v91 = vld [vmem:[%s4 + $0x238] sm:$0xff]
  %v92 = vld [vmem:[%s4 + $0x240] sm:$0xff]
  %v93 = vld [vmem:[%s4 + $0x248] sm:$0xff]
  %v94 = vld [vmem:[%s4 + $0x250] sm:$0xff]
  %v95 = vld [vmem:[%s4 + $0x258] sm:$0xff]
  %v96 = vld [vmem:[%s4 + $0x260] sm:$0xff]
  %v97 = vld [vmem:[%s4 + $0x268] sm:$0xff]
  %v98 = vld [vmem:[%s4 + $0x270] sm:$0xff]
  %v99 = vld [vmem:[%s4 + $0x278] sm:$0xff]
  %v100 = vld [vmem:[%s4 + $0x280] sm:$0xff]
  %v101 = vld [vmem:[%s4 + $0x288] sm:$0xff]
  %v102 = vld [vmem:[%s4 + $0x290] sm:$0xff]
  %v103 = vld [vmem:[%s4 + $0x298] sm:$0xff]
  %v104 = vld [vmem:[%s4 + $0x2a0] sm:$0xff]
  %v105 = vld [vmem:[%s4 + $0x2a8] sm:$0xff]
  %v106 = vld [vmem:[%s4 + $0x2b0] sm:$0xff]
  %v107 = vld [vmem:[%s4 + $0x2b8] sm:$0xff]
  %v108 = vld [vmem:[%s4 + $0x2c0] sm:$0xff]
  %v109 = vld [vmem:[%s4 + $0x2c8] sm:$0xff]
  %v110 = vld [vmem:[%s4 + $0x2d0] sm:$0xff]
  %v111 = vld [vmem:[%s4 + $0x2d8] sm:$0xff]
  %v112 = vld [vmem:[%s4 + $0x2e0] sm:$0xff]
  %v113 = vld [vmem:[%s4 + $0x2e8] sm:$0xff]
  %v114 = vld [vmem:[%s4 + $0x2f0] sm:$0xff]
  %v115 = vld [vmem:[%s4 + $0x2f8] sm:$0xff]
  %v116 = vld [vmem:[%s1] sm:$0xff]
  %v117 = vld [vmem:[%s1 + $0x8] sm:$0xff]
  %v118 = vld [vmem:[%s1 + $0x10] sm:$0xff]
  %v119 = vld [vmem:[%s1 + $0x18] sm:$0xff]
  %v120 = vld [vmem:[%s1 + $0x20] sm:$0xff]
  %v121 = vld [vmem:[%s1 + $0x28] sm:$0xff]
  %v122 = vld [vmem:[%s1 + $0x30] sm:$0xff]
  %v123 = vld [vmem:[%s1 + $0x38] sm:$0xff]
  %v124 = vld [vmem:[%s1 + $0x40] sm:$0xff]
  %v125 = vld [vmem:[%s1 + $0x48] sm:$0xff]
  %v126 = vld [vmem:[%s1 + $0x50] sm:$0xff]
  %v127 = vld [vmem:[%s1 + $0x58] sm:$0xff]
  %v128 = vld [vmem:[%s1 + $0x60] sm:$0xff]
  %v129 = vld [vmem:[%s1 + $0x68] sm:$0xff]
  %v130 = vld [vmem:[%s1 + $0x70] sm:$0xff]
  %v131 = vld [vmem:[%s1 + $0x78] sm:$0xff]
  %v132 = vld [vmem:[%s1 + $0x80] sm:$0xff]
  %v133 = vld [vmem:[%s1 + $0x88] sm:$0xff]
  %v134 = vld [vmem:[%s1 + $0x90] sm:$0xff]
  %v135 = vld [vmem:[%s1 + $0x98] sm:$0xff]
  %v136 = vld [vmem:[%s1 + $0xa0] sm:$0xff]
  %v137 = vld [vmem:[%s1 + $0xa8] sm:$0xff]
  %v138 = vld [vmem:[%s1 + $0xb0] sm:$0xff]
  %v139 = vld [vmem:[%s1 + $0xb8] sm:$0xff]
  %v140 = vld [vmem:[%s1 + $0xc0] sm:$0xff]
  %v141 = vld [vmem:[%s1 + $0xc8] sm:$0xff]
  %v142 = vld [vmem:[%s1 + $0xd0] sm:$0xff]
  %v143 = vld [vmem:[%s1 + $0xd8] sm:$0xff]
  %v144 = vld [vmem:[%s1 + $0xe0] sm:$0xff]
  %v145 = vld [vmem:[%s1 + $0xe8] sm:$0xff]
  %v146 = vld [vmem:[%s1 + $0xf0] sm:$0xff]
  %v147 = vld [vmem:[%s1 + $0xf8] sm:$0xff]
  %v148 = vld [vmem:[%s1 + $0x100] sm:$0xff]
  %v149 = vld [vmem:[%s1 + $0x108] sm:$0xff]
  %v150 = vld [vmem:[%s1 + $0x110] sm:$0xff]
  %v151 = vld [vmem:[%s1 + $0x118] sm:$0xff]
  %v152 = vld [vmem:[%s1 + $0x120] sm:$0xff]
  %v153 = vld [vmem:[%s1 + $0x128] sm:$0xff]
  %v154 = vld [vmem:[%s1 + $0x130] sm:$0xff]
  %v155 = vld [vmem:[%s1 + $0x138] sm:$0xff]
  %v156 = vld [vmem:[%s1 + $0x140] sm:$0xff]
  %v157 = vld [vmem:[%s1 + $0x148] sm:$0xff]
  %v158 = vld [vmem:[%s1 + $0x150] sm:$0xff]
  %v159 = vld [vmem:[%s1 + $0x158] sm:$0xff]
  %v160 = vld [vmem:[%s1 + $0x160] sm:$0xff]
  %v161 = vld [vmem:[%s1 + $0x168] sm:$0xff]
  %v162 = vld [vmem:[%s1 + $0x170] sm:$0xff]
  %v163 = vld [vmem:[%s1 + $0x178] sm:$0xff]
  %v164 = vld [vmem:[%s1 + $0x180] sm:$0xff]
  %v165 = vld [vmem:[%s1 + $0x188] sm:$0xff]
  %v166 = vld [vmem:[%s1 + $0x190] sm:$0xff]
  %v167 = vld [vmem:[%s1 + $0x198] sm:$0xff]
  %v168 = vld [vmem:[%s1 + $0x1a0] sm:$0xff]
  %v169 = vld [vmem:[%s1 + $0x1a8] sm:$0xff]
  %v170 = vld [vmem:[%s1 + $0x1b0] sm:$0xff]
  %v171 = vld [vmem:[%s1 + $0x1b8] sm:$0xff]
  %v172 = vld [vmem:[%s1 + $0x1c0] sm:$0xff]
  %v173 = vld [vmem:[%s1 + $0x1c8] sm:$0xff]
  %v174 = vld [vmem:[%s1 + $0x1d0] sm:$0xff]
  %v175 = vld [vmem:[%s1 + $0x1d8] sm:$0xff]
  %v176 = vld [vmem:[%s1 + $0x1e0] sm:$0xff]
  %v177 = vld [vmem:[%s1 + $0x1e8] sm:$0xff]
  %v178 = vld [vmem:[%s1 + $0x1f0] sm:$0xff]
  %v179 = vld [vmem:[%s1 + $0x1f8] sm:$0xff]
  %v180 = vld [vmem:[%s1 + $0x200] sm:$0xff]
  %v181 = vld [vmem:[%s1 + $0x208] sm:$0xff]
  %v182 = vld [vmem:[%s1 + $0x210] sm:$0xff]
  %v183 = vld [vmem:[%s1 + $0x218] sm:$0xff]
  %v184 = vld [vmem:[%s1 + $0x220] sm:$0xff]
  %v185 = vld [vmem:[%s1 + $0x228] sm:$0xff]
  %v186 = vld [vmem:[%s1 + $0x230] sm:$0xff]
  %v187 = vld [vmem:[%s1 + $0x238] sm:$0xff]
  %v188 = vld [vmem:[%s1 + $0x240] sm:$0xff]
  %v189 = vld [vmem:[%s1 + $0x248] sm:$0xff]
  %v190 = vld [vmem:[%s1 + $0x250] sm:$0xff]
  %v191 = vld [vmem:[%s1 + $0x258] sm:$0xff]
  %v192 = vld [vmem:[%s1 + $0x260] sm:$0xff]
  %v193 = vld [vmem:[%s1 + $0x268] sm:$0xff]
  %v194 = vld [vmem:[%s1 + $0x270] sm:$0xff]
  %v195 = vld [vmem:[%s1 + $0x278] sm:$0xff]
  %v196 = vld [vmem:[%s1 + $0x280] sm:$0xff]
  %v197 = vld [vmem:[%s1 + $0x288] sm:$0xff]
  %v198 = vld [vmem:[%s1 + $0x290] sm:$0xff]
  %v199 = vld [vmem:[%s1 + $0x298] sm:$0xff]
  %v200 = vld [vmem:[%s1 + $0x2a0] sm:$0xff]
  %v201 = vld [vmem:[%s1 + $0x2a8] sm:$0xff]
  %v202 = vld [vmem:[%s1 + $0x2b0] sm:$0xff]
  %v203 = vld [vmem:[%s1 + $0x2b8] sm:$0xff]
  %v204 = vld [vmem:[%s1 + $0x2c0] sm:$0xff]
  %v205 = vld [vmem:[%s1 + $0x2c8] sm:$0xff]
  %v206 = vld [vmem:[%s1 + $0x2d0] sm:$0xff]
  %v207 = vld [vmem:[%s1 + $0x2d8] sm:$0xff]
  %v208 = vld [vmem:[%s1 + $0x2e0] sm:$0xff]
  %v209 = vld [vmem:[%s1 + $0x2e8] sm:$0xff]
  %v210 = vld [vmem:[%s1 + $0x2f0] sm:$0xff]
  %v211 = vld [vmem:[%s1 + $0x2f8] sm:$0xff]
  %v212 = vld [vmem:[%s1 + $0x300] sm:$0xff]
  %v213 = vld [vmem:[%s1 + $0x308] sm:$0xff]
  %v214 = vld [vmem:[%s1 + $0x310] sm:$0xff]
  %v215 = vld [vmem:[%s1 + $0x318] sm:$0xff]
  %v216 = vld [vmem:[%s1 + $0x320] sm:$0xff]
  %v217 = vld [vmem:[%s1 + $0x328] sm:$0xff]
  %v218 = vld [vmem:[%s1 + $0x330] sm:$0xff]
  %v219 = vld [vmem:[%s1 + $0x338] sm:$0xff]
  %v220 = vld [vmem:[%s1 + $0x340] sm:$0xff]
  %v221 = vld [vmem:[%s1 + $0x348] sm:$0xff]
  %v222 = vld [vmem:[%s1 + $0x350] sm:$0xff]
  %v223 = vld [vmem:[%s1 + $0x358] sm:$0xff]
  %v224 = vld [vmem:[%s1 + $0x360] sm:$0xff]
  %v225 = vld [vmem:[%s1 + $0x368] sm:$0xff]
  %v226 = vld [vmem:[%s1 + $0x370] sm:$0xff]
  %v227 = vld [vmem:[%s1 + $0x378] sm:$0xff]
  %v228 = vld [vmem:[%s1 + $0x380] sm:$0xff]
  %v229 = vld [vmem:[%s1 + $0x388] sm:$0xff]
  %v230 = vld [vmem:[%s1 + $0x390] sm:$0xff]
  %v231 = vld [vmem:[%s1 + $0x398] sm:$0xff]
  %v232 = vld [vmem:[%s1 + $0x3a0] sm:$0xff]
  %v233 = vld [vmem:[%s1 + $0x3a8] sm:$0xff]
  %v234 = vld [vmem:[%s1 + $0x3b0] sm:$0xff]
  %v235 = vld [vmem:[%s1 + $0x3b8] sm:$0xff]
  %v236 = vld [vmem:[%s1 + $0x3c0] sm:$0xff]
  %v237 = vld [vmem:[%s1 + $0x3c8] sm:$0xff]
  %v238 = vld [vmem:[%s1 + $0x3d0] sm:$0xff]
  %v239 = vld [vmem:[%s1 + $0x3d8] sm:$0xff]
  %v240 = vld [vmem:[%s1 + $0x3e0] sm:$0xff]
  %v241 = vld [vmem:[%s1 + $0x3e8] sm:$0xff]
  %v242 = vld [vmem:[%s1 + $0x3f0] sm:$0xff]
  %v243 = vld [vmem:[%s1 + $0x3f8] sm:$0xff]
  %v244 = vld [vmem:[%s1 + $0x400] sm:$0xff]
  %v245 = vld [vmem:[%s1 + $0x408] sm:$0xff]
  %v246 = vld [vmem:[%s1 + $0x410] sm:$0xff]
  %v247 = vld [vmem:[%s1 + $0x418] sm:$0xff]
  %v248 = vld [vmem:[%s1 + $0x420] sm:$0xff]
  %v249 = vld [vmem:[%s1 + $0x428] sm:$0xff]
  %v250 = vld [vmem:[%s1 + $0x430] sm:$0xff]
  %v251 = vld [vmem:[%s1 + $0x438] sm:$0xff]
  %v252 = vld [vmem:[%s1 + $0x440] sm:$0xff]
  %v253 = vld [vmem:[%s1 + $0x448] sm:$0xff]
  %v254 = vld [vmem:[%s1 + $0x450] sm:$0xff]
  %v255 = vld [vmem:[%s1 + $0x458] sm:$0xff]
  %v256 = vld [vmem:[%s1 + $0x460] sm:$0xff]
  %v257 = vld [vmem:[%s1 + $0x468] sm:$0xff]
  %v258 = vld [vmem:[%s1 + $0x470] sm:$0xff]
  %v259 = vld [vmem:[%s1 + $0x478] sm:$0xff]
  %v260 = vld [vmem:[%s0] sm:$0xff]
  %v261 = vld [vmem:[%s0 + $0x8] sm:$0xff]
  %v262 = vld [vmem:[%s0 + $0x10] sm:$0xff]
  %v263 = vld [vmem:[%s0 + $0x18] sm:$0xff]
  %v264 = vld [vmem:[%s0 + $0x20] sm:$0xff]
  %v265 = vld [vmem:[%s0 + $0x28] sm:$0xff]
  %v266 = vld [vmem:[%s0 + $0x30] sm:$0xff]
  %v267 = vld [vmem:[%s0 + $0x38] sm:$0xff]
  %v268 = vld [vmem:[%s0 + $0x40] sm:$0xff]
  %v269 = vld [vmem:[%s0 + $0x48] sm:$0xff]
  %v270 = vld [vmem:[%s0 + $0x50] sm:$0xff]
  %v271 = vld [vmem:[%s0 + $0x58] sm:$0xff]
  %v272 = vld [vmem:[%s0 + $0x60] sm:$0xff]
  %v273 = vld [vmem:[%s0 + $0x68] sm:$0xff]
  %v274 = vld [vmem:[%s0 + $0x70] sm:$0xff]
  %v275 = vld [vmem:[%s0 + $0x78] sm:$0xff]
  %v276 = vld [vmem:[%s0 + $0x80] sm:$0xff]
  %v277 = vld [vmem:[%s0 + $0x88] sm:$0xff]
  %vm278 = vcmask 130048
  %v280 = vsel %vm278, %v117, 0
  %v283 = vsel %vm278, %v119, 0
  %v286 = vsel %vm278, %v121, 0
  %v289 = vsel %vm278, %v123, 0
  %v292 = vsel %vm278, %v125, 0
  %v295 = vsel %vm278, %v127, 0
  %v298 = vsel %vm278, %v129, 0
  %v301 = vsel %vm278, %v131, 0
  %v304 = vsel %vm278, %v133, 0
  %v307 = vsel %vm278, %v135, 0
  %v310 = vsel %vm278, %v137, 0
  %v313 = vsel %vm278, %v139, 0
  %v316 = vsel %vm278, %v141, 0
  %v319 = vsel %vm278, %v143, 0
  %v322 = vsel %vm278, %v145, 0
  %v325 = vsel %vm278, %v147, 0
  %v328 = vsel %vm278, %v149, 0
  %v331 = vsel %vm278, %v151, 0
  %v334 = vsel %vm278, %v153, 0
  %v337 = vsel %vm278, %v155, 0
  %v340 = vsel %vm278, %v157, 0
  %v343 = vsel %vm278, %v159, 0
  %v346 = vsel %vm278, %v161, 0
  %v349 = vsel %vm278, %v163, 0
  %v352 = vsel %vm278, %v165, 0
  %v355 = vsel %vm278, %v167, 0
  %v358 = vsel %vm278, %v169, 0
  %v361 = vsel %vm278, %v171, 0
  %v364 = vsel %vm278, %v173, 0
  %v367 = vsel %vm278, %v175, 0
  %v370 = vsel %vm278, %v177, 0
  %v373 = vsel %vm278, %v179, 0
  %v376 = vsel %vm278, %v181, 0
  %v379 = vsel %vm278, %v183, 0
  %v382 = vsel %vm278, %v185, 0
  %v385 = vsel %vm278, %v187, 0
  %v388 = vsel %vm278, %v189, 0
  %v391 = vsel %vm278, %v191, 0
  %v394 = vsel %vm278, %v193, 0
  %v397 = vsel %vm278, %v195, 0
  %v400 = vsel %vm278, %v197, 0
  %v403 = vsel %vm278, %v199, 0
  %v406 = vsel %vm278, %v201, 0
  %v409 = vsel %vm278, %v203, 0
  %v412 = vsel %vm278, %v205, 0
  %v415 = vsel %vm278, %v207, 0
  %v418 = vsel %vm278, %v209, 0
  %v421 = vsel %vm278, %v211, 0
  %v424 = vsel %vm278, %v213, 0
  %v427 = vsel %vm278, %v215, 0
  %v430 = vsel %vm278, %v217, 0
  %v433 = vsel %vm278, %v219, 0
  %v436 = vsel %vm278, %v221, 0
  %v439 = vsel %vm278, %v223, 0
  %v442 = vsel %vm278, %v225, 0
  %v445 = vsel %vm278, %v227, 0
  %v448 = vsel %vm278, %v229, 0
  %v451 = vsel %vm278, %v231, 0
  %v454 = vsel %vm278, %v233, 0
  %v457 = vsel %vm278, %v235, 0
  %v460 = vsel %vm278, %v237, 0
  %v463 = vsel %vm278, %v239, 0
  %v466 = vsel %vm278, %v241, 0
  %v469 = vsel %vm278, %v243, 0
  %v472 = vsel %vm278, %v245, 0
  %v475 = vsel %vm278, %v247, 0
  %v478 = vsel %vm278, %v249, 0
  %v481 = vsel %vm278, %v251, 0
  %v484 = vsel %vm278, %v253, 0
  %v487 = vsel %vm278, %v255, 0
  %v490 = vsel %vm278, %v257, 0
  %v493 = vsel %vm278, %v259, 0
  %495 = vmatpush.msra.mxu0 %v275
  %496 = vmatpush.msra.mxu0 %v274
  %497 = vmatpush.msra.mxu0 %v273
  %498 = vmatpush.msra.mxu0 %v272
  %499 = vmatpush.msra.mxu0 %v271
  %500 = vmatpush.msra.mxu0 %v270
  %501 = vmatpush.msra.mxu0 %v269
  %502 = vmatpush.msra.mxu0 %v268
  %503 = vmatpush.msra.mxu0 %v267
  %504 = vmatpush.msra.mxu0 %v266
  %505 = vmatpush.msra.mxu0 %v265
  %506 = vmatpush.msra.mxu0 %v264
  %507 = vmatpush.msra.mxu0 %v263
  %508 = vmatpush.msra.mxu0 %v262
  %509 = vmatpush.msra.mxu0 %v261
  %510 = vmatpush.msra.mxu0 %v260
  %511 = vmatmul.f32.gmra.mxu0 %v116
  %v512 = vpop.f32.mrf.mxu0
  %v513 = vadd.f32 %v20, %v512
  %514 = vmatmul.f32.gmra.mxu0 %v118
  %v515 = vpop.f32.mrf.mxu0
  %v516 = vadd.f32 %v21, %v515
  %517 = vmatmul.f32.gmra.mxu0 %v120
  %v518 = vpop.f32.mrf.mxu0
  %v519 = vadd.f32 %v22, %v518
  %520 = vmatmul.f32.gmra.mxu0 %v122
  %v521 = vpop.f32.mrf.mxu0
  %v522 = vadd.f32 %v23, %v521
  %523 = vmatmul.f32.gmra.mxu0 %v124
  %v524 = vpop.f32.mrf.mxu0
  %v525 = vadd.f32 %v24, %v524
  %526 = vmatmul.f32.gmra.mxu0 %v126
  %v527 = vpop.f32.mrf.mxu0
  %v528 = vadd.f32 %v25, %v527
  %529 = vmatmul.f32.gmra.mxu0 %v128
  %v530 = vpop.f32.mrf.mxu0
  %v531 = vadd.f32 %v26, %v530
  %532 = vmatmul.f32.gmra.mxu0 %v130
  %v533 = vpop.f32.mrf.mxu0
  %v534 = vadd.f32 %v27, %v533
  %535 = vmatmul.f32.gmra.mxu0 %v132
  %v536 = vpop.f32.mrf.mxu0
  %v537 = vadd.f32 %v28, %v536
  %538 = vmatmul.f32.gmra.mxu0 %v134
  %v539 = vpop.f32.mrf.mxu0
  %v540 = vadd.f32 %v29, %v539
  %541 = vmatmul.f32.gmra.mxu0 %v136
  %v542 = vpop.f32.mrf.mxu0
  %v543 = vadd.f32 %v30, %v542
  %544 = vmatmul.f32.gmra.mxu0 %v138
  %v545 = vpop.f32.mrf.mxu0
  %v546 = vadd.f32 %v31, %v545
  %547 = vmatmul.f32.gmra.mxu0 %v140
  %v548 = vpop.f32.mrf.mxu0
  %v549 = vadd.f32 %v32, %v548
  %550 = vmatmul.f32.gmra.mxu0 %v142
  %v551 = vpop.f32.mrf.mxu0
  %v552 = vadd.f32 %v33, %v551
  %553 = vmatmul.f32.gmra.mxu0 %v144
  %v554 = vpop.f32.mrf.mxu0
  %v555 = vadd.f32 %v34, %v554
  %556 = vmatmul.f32.gmra.mxu0 %v146
  %v557 = vpop.f32.mrf.mxu0
  %v558 = vadd.f32 %v35, %v557
  %559 = vmatmul.f32.gmra.mxu0 %v148
  %v560 = vpop.f32.mrf.mxu0
  %v561 = vadd.f32 %v36, %v560
  %562 = vmatmul.f32.gmra.mxu0 %v150
  %v563 = vpop.f32.mrf.mxu0
  %v564 = vadd.f32 %v37, %v563
  %565 = vmatmul.f32.gmra.mxu0 %v152
  %v566 = vpop.f32.mrf.mxu0
  %v567 = vadd.f32 %v38, %v566
  %568 = vmatmul.f32.gmra.mxu0 %v154
  %v569 = vpop.f32.mrf.mxu0
  %v570 = vadd.f32 %v39, %v569
  %571 = vmatmul.f32.gmra.mxu0 %v156
  %v572 = vpop.f32.mrf.mxu0
  %v573 = vadd.f32 %v40, %v572
  %574 = vmatmul.f32.gmra.mxu0 %v158
  %v575 = vpop.f32.mrf.mxu0
  %v576 = vadd.f32 %v41, %v575
  %577 = vmatmul.f32.gmra.mxu0 %v160
  %v578 = vpop.f32.mrf.mxu0
  %v579 = vadd.f32 %v42, %v578
  %580 = vmatmul.f32.gmra.mxu0 %v162
  %v581 = vpop.f32.mrf.mxu0
  %v582 = vadd.f32 %v43, %v581
  %583 = vmatmul.f32.gmra.mxu0 %v164
  %v584 = vpop.f32.mrf.mxu0
  %v585 = vadd.f32 %v44, %v584
  %586 = vmatmul.f32.gmra.mxu0 %v166
  %v587 = vpop.f32.mrf.mxu0
  %v588 = vadd.f32 %v45, %v587
  %589 = vmatmul.f32.gmra.mxu0 %v168
  %v590 = vpop.f32.mrf.mxu0
  %v591 = vadd.f32 %v46, %v590
  %592 = vmatmul.f32.gmra.mxu0 %v170
  %v593 = vpop.f32.mrf.mxu0
  %v594 = vadd.f32 %v47, %v593
  %595 = vmatmul.f32.gmra.mxu0 %v172
  %v596 = vpop.f32.mrf.mxu0
  %v597 = vadd.f32 %v48, %v596
  %598 = vmatmul.f32.gmra.mxu0 %v174
  %v599 = vpop.f32.mrf.mxu0
  %v600 = vadd.f32 %v49, %v599
  %601 = vmatmul.f32.gmra.mxu0 %v176
  %v602 = vpop.f32.mrf.mxu0
  %v603 = vadd.f32 %v50, %v602
  %604 = vmatmul.f32.gmra.mxu0 %v178
  %v605 = vpop.f32.mrf.mxu0
  %v606 = vadd.f32 %v51, %v605
  %607 = vmatmul.f32.gmra.mxu0 %v180
  %v608 = vpop.f32.mrf.mxu0
  %v609 = vadd.f32 %v52, %v608
  %610 = vmatmul.f32.gmra.mxu0 %v182
  %v611 = vpop.f32.mrf.mxu0
  %v612 = vadd.f32 %v53, %v611
  %613 = vmatmul.f32.gmra.mxu0 %v184
  %v614 = vpop.f32.mrf.mxu0
  %v615 = vadd.f32 %v54, %v614
  %616 = vmatmul.f32.gmra.mxu0 %v186
  %v617 = vpop.f32.mrf.mxu0
  %v618 = vadd.f32 %v55, %v617
  %619 = vmatmul.f32.gmra.mxu0 %v188
  %v620 = vpop.f32.mrf.mxu0
  %v621 = vadd.f32 %v56, %v620
  %622 = vmatmul.f32.gmra.mxu0 %v190
  %v623 = vpop.f32.mrf.mxu0
  %v624 = vadd.f32 %v57, %v623
  %625 = vmatmul.f32.gmra.mxu0 %v192
  %v626 = vpop.f32.mrf.mxu0
  %v627 = vadd.f32 %v58, %v626
  %628 = vmatmul.f32.gmra.mxu0 %v194
  %v629 = vpop.f32.mrf.mxu0
  %v630 = vadd.f32 %v59, %v629
  %631 = vmatmul.f32.gmra.mxu0 %v196
  %v632 = vpop.f32.mrf.mxu0
  %v633 = vadd.f32 %v60, %v632
  %634 = vmatmul.f32.gmra.mxu0 %v198
  %v635 = vpop.f32.mrf.mxu0
  %v636 = vadd.f32 %v61, %v635
  %637 = vmatmul.f32.gmra.mxu0 %v200
  %v638 = vpop.f32.mrf.mxu0
  %v639 = vadd.f32 %v62, %v638
  %640 = vmatmul.f32.gmra.mxu0 %v202
  %v641 = vpop.f32.mrf.mxu0
  %v642 = vadd.f32 %v63, %v641
  %643 = vmatmul.f32.gmra.mxu0 %v204
  %v644 = vpop.f32.mrf.mxu0
  %v645 = vadd.f32 %v64, %v644
  %646 = vmatmul.f32.gmra.mxu0 %v206
  %v647 = vpop.f32.mrf.mxu0
  %v648 = vadd.f32 %v65, %v647
  %649 = vmatmul.f32.gmra.mxu0 %v208
  %v650 = vpop.f32.mrf.mxu0
  %v651 = vadd.f32 %v66, %v650
  %652 = vmatmul.f32.gmra.mxu0 %v210
  %v653 = vpop.f32.mrf.mxu0
  %v654 = vadd.f32 %v67, %v653
  %655 = vmatmul.f32.gmra.mxu0 %v212
  %v656 = vpop.f32.mrf.mxu0
  %v657 = vadd.f32 %v68, %v656
  %658 = vmatmul.f32.gmra.mxu0 %v214
  %v659 = vpop.f32.mrf.mxu0
  %v660 = vadd.f32 %v69, %v659
  %661 = vmatmul.f32.gmra.mxu0 %v216
  %v662 = vpop.f32.mrf.mxu0
  %v663 = vadd.f32 %v70, %v662
  %664 = vmatmul.f32.gmra.mxu0 %v218
  %v665 = vpop.f32.mrf.mxu0
  %v666 = vadd.f32 %v71, %v665
  %667 = vmatmul.f32.gmra.mxu0 %v220
  %v668 = vpop.f32.mrf.mxu0
  %v669 = vadd.f32 %v72, %v668
  %670 = vmatmul.f32.gmra.mxu0 %v222
  %v671 = vpop.f32.mrf.mxu0
  %v672 = vadd.f32 %v73, %v671
  %673 = vmatmul.f32.gmra.mxu0 %v224
  %v674 = vpop.f32.mrf.mxu0
  %v675 = vadd.f32 %v74, %v674
  %676 = vmatmul.f32.gmra.mxu0 %v226
  %v677 = vpop.f32.mrf.mxu0
  %v678 = vadd.f32 %v75, %v677
  %679 = vmatmul.f32.gmra.mxu0 %v228
  %v680 = vpop.f32.mrf.mxu0
  %v681 = vadd.f32 %v76, %v680
  %682 = vmatmul.f32.gmra.mxu0 %v230
  %v683 = vpop.f32.mrf.mxu0
  %v684 = vadd.f32 %v77, %v683
  %685 = vmatmul.f32.gmra.mxu0 %v232
  %v686 = vpop.f32.mrf.mxu0
  %v687 = vadd.f32 %v78, %v686
  %688 = vmatmul.f32.gmra.mxu0 %v234
  %v689 = vpop.f32.mrf.mxu0
  %v690 = vadd.f32 %v79, %v689
  %691 = vmatmul.f32.gmra.mxu0 %v236
  %v692 = vpop.f32.mrf.mxu0
  %v693 = vadd.f32 %v80, %v692
  %694 = vmatmul.f32.gmra.mxu0 %v238
  %v695 = vpop.f32.mrf.mxu0
  %v696 = vadd.f32 %v81, %v695
  %697 = vmatmul.f32.gmra.mxu0 %v240
  %v698 = vpop.f32.mrf.mxu0
  %v699 = vadd.f32 %v82, %v698
  %700 = vmatmul.f32.gmra.mxu0 %v242
  %v701 = vpop.f32.mrf.mxu0
  %v702 = vadd.f32 %v83, %v701
  %703 = vmatmul.f32.gmra.mxu0 %v244
  %v704 = vpop.f32.mrf.mxu0
  %v705 = vadd.f32 %v84, %v704
  %706 = vmatmul.f32.gmra.mxu0 %v246
  %v707 = vpop.f32.mrf.mxu0
  %v708 = vadd.f32 %v85, %v707
  %709 = vmatmul.f32.gmra.mxu0 %v248
  %v710 = vpop.f32.mrf.mxu0
  %v711 = vadd.f32 %v86, %v710
  %712 = vmatmul.f32.gmra.mxu0 %v250
  %v713 = vpop.f32.mrf.mxu0
  %v714 = vadd.f32 %v87, %v713
  %715 = vmatmul.f32.gmra.mxu0 %v252
  %v716 = vpop.f32.mrf.mxu0
  %v717 = vadd.f32 %v88, %v716
  %718 = vmatmul.f32.gmra.mxu0 %v254
  %v719 = vpop.f32.mrf.mxu0
  %v720 = vadd.f32 %v89, %v719
  %721 = vmatmul.f32.gmra.mxu0 %v256
  %v722 = vpop.f32.mrf.mxu0
  %v723 = vadd.f32 %v90, %v722
  %724 = vmatmul.f32.gmra.mxu0 %v258
  %v725 = vpop.f32.mrf.mxu0
  %v726 = vadd.f32 %v91, %v725
  %727 = vdwg.mxu0
  %728 = vmatpush.msra.mxu0 0.0
  %729 = vmatpush.msra.mxu0 0.0
  %730 = vmatpush.msra.mxu0 0.0
  %731 = vmatpush.msra.mxu0 0.0
  %732 = vmatpush.msra.mxu0 0.0
  %733 = vmatpush.msra.mxu0 0.0
  %734 = vmatpush.msra.mxu0 0.0
  %735 = vmatpush.msra.mxu0 0.0
  %736 = vmatpush.msra.mxu0 0.0
  %737 = vmatpush.msra.mxu0 0.0
  %738 = vmatpush.msra.mxu0 0.0
  %739 = vmatpush.msra.mxu0 0.0
  %740 = vmatpush.msra.mxu0 0.0
  %741 = vmatpush.msra.mxu0 0.0
  %742 = vmatpush.msra.mxu0 %v277
  %743 = vmatpush.msra.mxu0 %v276
  %744 = vmatmul.f32.gmra.mxu0 %v280
  %v745 = vpop.f32.mrf.mxu0
  %v746 = vadd.f32 %v513, %v745
  %747 = vmatmul.f32.gmra.mxu0 %v283
  %v748 = vpop.f32.mrf.mxu0
  %v749 = vadd.f32 %v516, %v748
  %750 = vmatmul.f32.gmra.mxu0 %v286
  %v751 = vpop.f32.mrf.mxu0
  %v752 = vadd.f32 %v519, %v751
  %753 = vmatmul.f32.gmra.mxu0 %v289
  %v754 = vpop.f32.mrf.mxu0
  %v755 = vadd.f32 %v522, %v754
  %756 = vmatmul.f32.gmra.mxu0 %v292
  %v757 = vpop.f32.mrf.mxu0
  %v758 = vadd.f32 %v525, %v757
  %759 = vmatmul.f32.gmra.mxu0 %v295
  %v760 = vpop.f32.mrf.mxu0
  %v761 = vadd.f32 %v528, %v760
  %762 = vmatmul.f32.gmra.mxu0 %v298
  %v763 = vpop.f32.mrf.mxu0
  %v764 = vadd.f32 %v531, %v763
  %765 = vmatmul.f32.gmra.mxu0 %v301
  %v766 = vpop.f32.mrf.mxu0
  %v767 = vadd.f32 %v534, %v766
  %768 = vmatmul.f32.gmra.mxu0 %v304
  %v769 = vpop.f32.mrf.mxu0
  %v770 = vadd.f32 %v537, %v769
  %771 = vmatmul.f32.gmra.mxu0 %v307
  %v772 = vpop.f32.mrf.mxu0
  %v773 = vadd.f32 %v540, %v772
  %774 = vmatmul.f32.gmra.mxu0 %v310
  %v775 = vpop.f32.mrf.mxu0
  %v776 = vadd.f32 %v543, %v775
  %777 = vmatmul.f32.gmra.mxu0 %v313
  %v778 = vpop.f32.mrf.mxu0
  %v779 = vadd.f32 %v546, %v778
  %780 = vmatmul.f32.gmra.mxu0 %v316
  %v781 = vpop.f32.mrf.mxu0
  %v782 = vadd.f32 %v549, %v781
  %783 = vmatmul.f32.gmra.mxu0 %v319
  %v784 = vpop.f32.mrf.mxu0
  %v785 = vadd.f32 %v552, %v784
  %786 = vmatmul.f32.gmra.mxu0 %v322
  %v787 = vpop.f32.mrf.mxu0
  %v788 = vadd.f32 %v555, %v787
  %789 = vmatmul.f32.gmra.mxu0 %v325
  %v790 = vpop.f32.mrf.mxu0
  %v791 = vadd.f32 %v558, %v790
  %792 = vmatmul.f32.gmra.mxu0 %v328
  %v793 = vpop.f32.mrf.mxu0
  %v794 = vadd.f32 %v561, %v793
  %795 = vmatmul.f32.gmra.mxu0 %v331
  %v796 = vpop.f32.mrf.mxu0
  %v797 = vadd.f32 %v564, %v796
  %798 = vmatmul.f32.gmra.mxu0 %v334
  %v799 = vpop.f32.mrf.mxu0
  %v800 = vadd.f32 %v567, %v799
  %801 = vmatmul.f32.gmra.mxu0 %v337
  %v802 = vpop.f32.mrf.mxu0
  %v803 = vadd.f32 %v570, %v802
  %804 = vmatmul.f32.gmra.mxu0 %v340
  %v805 = vpop.f32.mrf.mxu0
  %v806 = vadd.f32 %v573, %v805
  %807 = vmatmul.f32.gmra.mxu0 %v343
  %v808 = vpop.f32.mrf.mxu0
  %v809 = vadd.f32 %v576, %v808
  %810 = vmatmul.f32.gmra.mxu0 %v346
  %v811 = vpop.f32.mrf.mxu0
  %v812 = vadd.f32 %v579, %v811
  %813 = vmatmul.f32.gmra.mxu0 %v349
  %v814 = vpop.f32.mrf.mxu0
  %v815 = vadd.f32 %v582, %v814
  %816 = vmatmul.f32.gmra.mxu0 %v352
  %v817 = vpop.f32.mrf.mxu0
  %v818 = vadd.f32 %v585, %v817
  %819 = vmatmul.f32.gmra.mxu0 %v355
  %v820 = vpop.f32.mrf.mxu0
  %v821 = vadd.f32 %v588, %v820
  %822 = vmatmul.f32.gmra.mxu0 %v358
  %v823 = vpop.f32.mrf.mxu0
  %v824 = vadd.f32 %v591, %v823
  %825 = vmatmul.f32.gmra.mxu0 %v361
  %v826 = vpop.f32.mrf.mxu0
  %v827 = vadd.f32 %v594, %v826
  %828 = vmatmul.f32.gmra.mxu0 %v364
  %v829 = vpop.f32.mrf.mxu0
  %v830 = vadd.f32 %v597, %v829
  %831 = vmatmul.f32.gmra.mxu0 %v367
  %v832 = vpop.f32.mrf.mxu0
  %v833 = vadd.f32 %v600, %v832
  %834 = vmatmul.f32.gmra.mxu0 %v370
  %v835 = vpop.f32.mrf.mxu0
  %v836 = vadd.f32 %v603, %v835
  %837 = vmatmul.f32.gmra.mxu0 %v373
  %v838 = vpop.f32.mrf.mxu0
  %v839 = vadd.f32 %v606, %v838
  %840 = vmatmul.f32.gmra.mxu0 %v376
  %v841 = vpop.f32.mrf.mxu0
  %v842 = vadd.f32 %v609, %v841
  %843 = vmatmul.f32.gmra.mxu0 %v379
  %v844 = vpop.f32.mrf.mxu0
  %v845 = vadd.f32 %v612, %v844
  %846 = vmatmul.f32.gmra.mxu0 %v382
  %v847 = vpop.f32.mrf.mxu0
  %v848 = vadd.f32 %v615, %v847
  %849 = vmatmul.f32.gmra.mxu0 %v385
  %v850 = vpop.f32.mrf.mxu0
  %v851 = vadd.f32 %v618, %v850
  %852 = vmatmul.f32.gmra.mxu0 %v388
  %v853 = vpop.f32.mrf.mxu0
  %v854 = vadd.f32 %v621, %v853
  %855 = vmatmul.f32.gmra.mxu0 %v391
  %v856 = vpop.f32.mrf.mxu0
  %v857 = vadd.f32 %v624, %v856
  %858 = vmatmul.f32.gmra.mxu0 %v394
  %v859 = vpop.f32.mrf.mxu0
  %v860 = vadd.f32 %v627, %v859
  %861 = vmatmul.f32.gmra.mxu0 %v397
  %v862 = vpop.f32.mrf.mxu0
  %v863 = vadd.f32 %v630, %v862
  %864 = vmatmul.f32.gmra.mxu0 %v400
  %v865 = vpop.f32.mrf.mxu0
  %v866 = vadd.f32 %v633, %v865
  %867 = vmatmul.f32.gmra.mxu0 %v403
  %v868 = vpop.f32.mrf.mxu0
  %v869 = vadd.f32 %v636, %v868
  %870 = vmatmul.f32.gmra.mxu0 %v406
  %v871 = vpop.f32.mrf.mxu0
  %v872 = vadd.f32 %v639, %v871
  %873 = vmatmul.f32.gmra.mxu0 %v409
  %v874 = vpop.f32.mrf.mxu0
  %v875 = vadd.f32 %v642, %v874
  %876 = vmatmul.f32.gmra.mxu0 %v412
  %v877 = vpop.f32.mrf.mxu0
  %v878 = vadd.f32 %v645, %v877
  %879 = vmatmul.f32.gmra.mxu0 %v415
  %v880 = vpop.f32.mrf.mxu0
  %v881 = vadd.f32 %v648, %v880
  %882 = vmatmul.f32.gmra.mxu0 %v418
  %v883 = vpop.f32.mrf.mxu0
  %v884 = vadd.f32 %v651, %v883
  %885 = vmatmul.f32.gmra.mxu0 %v421
  %v886 = vpop.f32.mrf.mxu0
  %v887 = vadd.f32 %v654, %v886
  %888 = vmatmul.f32.gmra.mxu0 %v424
  %v889 = vpop.f32.mrf.mxu0
  %v890 = vadd.f32 %v657, %v889
  %891 = vmatmul.f32.gmra.mxu0 %v427
  %v892 = vpop.f32.mrf.mxu0
  %v893 = vadd.f32 %v660, %v892
  %894 = vmatmul.f32.gmra.mxu0 %v430
  %v895 = vpop.f32.mrf.mxu0
  %v896 = vadd.f32 %v663, %v895
  %897 = vmatmul.f32.gmra.mxu0 %v433
  %v898 = vpop.f32.mrf.mxu0
  %v899 = vadd.f32 %v666, %v898
  %900 = vmatmul.f32.gmra.mxu0 %v436
  %v901 = vpop.f32.mrf.mxu0
  %v902 = vadd.f32 %v669, %v901
  %903 = vmatmul.f32.gmra.mxu0 %v439
  %v904 = vpop.f32.mrf.mxu0
  %v905 = vadd.f32 %v672, %v904
  %906 = vmatmul.f32.gmra.mxu0 %v442
  %v907 = vpop.f32.mrf.mxu0
  %v908 = vadd.f32 %v675, %v907
  %909 = vmatmul.f32.gmra.mxu0 %v445
  %v910 = vpop.f32.mrf.mxu0
  %v911 = vadd.f32 %v678, %v910
  %912 = vmatmul.f32.gmra.mxu0 %v448
  %v913 = vpop.f32.mrf.mxu0
  %v914 = vadd.f32 %v681, %v913
  %915 = vmatmul.f32.gmra.mxu0 %v451
  %v916 = vpop.f32.mrf.mxu0
  %v917 = vadd.f32 %v684, %v916
  %918 = vmatmul.f32.gmra.mxu0 %v454
  %v919 = vpop.f32.mrf.mxu0
  %v920 = vadd.f32 %v687, %v919
  %921 = vmatmul.f32.gmra.mxu0 %v457
  %v922 = vpop.f32.mrf.mxu0
  %v923 = vadd.f32 %v690, %v922
  %924 = vmatmul.f32.gmra.mxu0 %v460
  %v925 = vpop.f32.mrf.mxu0
  %v926 = vadd.f32 %v693, %v925
  %927 = vmatmul.f32.gmra.mxu0 %v463
  %v928 = vpop.f32.mrf.mxu0
  %v929 = vadd.f32 %v696, %v928
  %930 = vmatmul.f32.gmra.mxu0 %v466
  %v931 = vpop.f32.mrf.mxu0
  %v932 = vadd.f32 %v699, %v931
  %933 = vmatmul.f32.gmra.mxu0 %v469
  %v934 = vpop.f32.mrf.mxu0
  %v935 = vadd.f32 %v702, %v934
  %936 = vmatmul.f32.gmra.mxu0 %v472
  %v937 = vpop.f32.mrf.mxu0
  %v938 = vadd.f32 %v705, %v937
  %939 = vmatmul.f32.gmra.mxu0 %v475
  %v940 = vpop.f32.mrf.mxu0
  %v941 = vadd.f32 %v708, %v940
  %942 = vmatmul.f32.gmra.mxu0 %v478
  %v943 = vpop.f32.mrf.mxu0
  %v944 = vadd.f32 %v711, %v943
  %945 = vmatmul.f32.gmra.mxu0 %v481
  %v946 = vpop.f32.mrf.mxu0
  %v947 = vadd.f32 %v714, %v946
  %948 = vmatmul.f32.gmra.mxu0 %v484
  %v949 = vpop.f32.mrf.mxu0
  %v950 = vadd.f32 %v717, %v949
  %951 = vmatmul.f32.gmra.mxu0 %v487
  %v952 = vpop.f32.mrf.mxu0
  %v953 = vadd.f32 %v720, %v952
  %954 = vmatmul.f32.gmra.mxu0 %v490
  %v955 = vpop.f32.mrf.mxu0
  %v956 = vadd.f32 %v723, %v955
  %957 = vmatmul.f32.gmra.mxu0 %v493
  %v958 = vpop.f32.mrf.mxu0
  %v959 = vadd.f32 %v726, %v958
  %960 = vdwg.mxu0
  %v961 = vmul.f32 %v746, 0.16666667
  %v962 = vmul.f32 %v749, 0.16666667
  %v963 = vmul.f32 %v752, 0.16666667
  %v964 = vmul.f32 %v755, 0.16666667
  %v965 = vmul.f32 %v758, 0.16666667
  %v966 = vmul.f32 %v761, 0.16666667
  %v967 = vmul.f32 %v764, 0.16666667
  %v968 = vmul.f32 %v767, 0.16666667
  %v969 = vmul.f32 %v770, 0.16666667
  %v970 = vmul.f32 %v773, 0.16666667
  %v971 = vmul.f32 %v776, 0.16666667
  %v972 = vmul.f32 %v779, 0.16666667
  %v973 = vmul.f32 %v782, 0.16666667
  %v974 = vmul.f32 %v785, 0.16666667
  %v975 = vmul.f32 %v788, 0.16666667
  %v976 = vmul.f32 %v791, 0.16666667
  %v977 = vmul.f32 %v794, 0.16666667
  %v978 = vmul.f32 %v797, 0.16666667
  %v979 = vmul.f32 %v800, 0.16666667
  %v980 = vmul.f32 %v803, 0.16666667
  %v981 = vmul.f32 %v806, 0.16666667
  %v982 = vmul.f32 %v809, 0.16666667
  %v983 = vmul.f32 %v812, 0.16666667
  %v984 = vmul.f32 %v815, 0.16666667
  %v985 = vmul.f32 %v818, 0.16666667
  %v986 = vmul.f32 %v821, 0.16666667
  %v987 = vmul.f32 %v824, 0.16666667
  %v988 = vmul.f32 %v827, 0.16666667
  %v989 = vmul.f32 %v830, 0.16666667
  %v990 = vmul.f32 %v833, 0.16666667
  %v991 = vmul.f32 %v836, 0.16666667
  %v992 = vmul.f32 %v839, 0.16666667
  %v993 = vmul.f32 %v842, 0.16666667
  %v994 = vmul.f32 %v845, 0.16666667
  %v995 = vmul.f32 %v848, 0.16666667
  %v996 = vmul.f32 %v851, 0.16666667
  %v997 = vmul.f32 %v854, 0.16666667
  %v998 = vmul.f32 %v857, 0.16666667
  %v999 = vmul.f32 %v860, 0.16666667
  %v1000 = vmul.f32 %v863, 0.16666667
  %v1001 = vmul.f32 %v866, 0.16666667
  %v1002 = vmul.f32 %v869, 0.16666667
  %v1003 = vmul.f32 %v872, 0.16666667
  %v1004 = vmul.f32 %v875, 0.16666667
  %v1005 = vmul.f32 %v878, 0.16666667
  %v1006 = vmul.f32 %v881, 0.16666667
  %v1007 = vmul.f32 %v884, 0.16666667
  %v1008 = vmul.f32 %v887, 0.16666667
  %v1009 = vmul.f32 %v890, 0.16666667
  %v1010 = vmul.f32 %v893, 0.16666667
  %v1011 = vmul.f32 %v896, 0.16666667
  %v1012 = vmul.f32 %v899, 0.16666667
  %v1013 = vmul.f32 %v902, 0.16666667
  %v1014 = vmul.f32 %v905, 0.16666667
  %v1015 = vmul.f32 %v908, 0.16666667
  %v1016 = vmul.f32 %v911, 0.16666667
  %v1017 = vmul.f32 %v914, 0.16666667
  %v1018 = vmul.f32 %v917, 0.16666667
  %v1019 = vmul.f32 %v920, 0.16666667
  %v1020 = vmul.f32 %v923, 0.16666667
  %v1021 = vmul.f32 %v926, 0.16666667
  %v1022 = vmul.f32 %v929, 0.16666667
  %v1023 = vmul.f32 %v932, 0.16666667
  %v1024 = vmul.f32 %v935, 0.16666667
  %v1025 = vmul.f32 %v938, 0.16666667
  %v1026 = vmul.f32 %v941, 0.16666667
  %v1027 = vmul.f32 %v944, 0.16666667
  %v1028 = vmul.f32 %v947, 0.16666667
  %v1029 = vmul.f32 %v950, 0.16666667
  %v1030 = vmul.f32 %v953, 0.16666667
  %v1031 = vmul.f32 %v956, 0.16666667
  %v1032 = vmul.f32 %v959, 0.16666667
  %v1033 = vadd.f32 %v961, 0.5
  %v1034 = vadd.f32 %v962, 0.5
  %v1035 = vadd.f32 %v963, 0.5
  %v1036 = vadd.f32 %v964, 0.5
  %v1037 = vadd.f32 %v965, 0.5
  %v1038 = vadd.f32 %v966, 0.5
  %v1039 = vadd.f32 %v967, 0.5
  %v1040 = vadd.f32 %v968, 0.5
  %v1041 = vadd.f32 %v969, 0.5
  %v1042 = vadd.f32 %v970, 0.5
  %v1043 = vadd.f32 %v971, 0.5
  %v1044 = vadd.f32 %v972, 0.5
  %v1045 = vadd.f32 %v973, 0.5
  %v1046 = vadd.f32 %v974, 0.5
  %v1047 = vadd.f32 %v975, 0.5
  %v1048 = vadd.f32 %v976, 0.5
  %v1049 = vadd.f32 %v977, 0.5
  %v1050 = vadd.f32 %v978, 0.5
  %v1051 = vadd.f32 %v979, 0.5
  %v1052 = vadd.f32 %v980, 0.5
  %v1053 = vadd.f32 %v981, 0.5
  %v1054 = vadd.f32 %v982, 0.5
  %v1055 = vadd.f32 %v983, 0.5
  %v1056 = vadd.f32 %v984, 0.5
  %v1057 = vadd.f32 %v985, 0.5
  %v1058 = vadd.f32 %v986, 0.5
  %v1059 = vadd.f32 %v987, 0.5
  %v1060 = vadd.f32 %v988, 0.5
  %v1061 = vadd.f32 %v989, 0.5
  %v1062 = vadd.f32 %v990, 0.5
  %v1063 = vadd.f32 %v991, 0.5
  %v1064 = vadd.f32 %v992, 0.5
  %v1065 = vadd.f32 %v993, 0.5
  %v1066 = vadd.f32 %v994, 0.5
  %v1067 = vadd.f32 %v995, 0.5
  %v1068 = vadd.f32 %v996, 0.5
  %v1069 = vadd.f32 %v997, 0.5
  %v1070 = vadd.f32 %v998, 0.5
  %v1071 = vadd.f32 %v999, 0.5
  %v1072 = vadd.f32 %v1000, 0.5
  %v1073 = vadd.f32 %v1001, 0.5
  %v1074 = vadd.f32 %v1002, 0.5
  %v1075 = vadd.f32 %v1003, 0.5
  %v1076 = vadd.f32 %v1004, 0.5
  %v1077 = vadd.f32 %v1005, 0.5
  %v1078 = vadd.f32 %v1006, 0.5
  %v1079 = vadd.f32 %v1007, 0.5
  %v1080 = vadd.f32 %v1008, 0.5
  %v1081 = vadd.f32 %v1009, 0.5
  %v1082 = vadd.f32 %v1010, 0.5
  %v1083 = vadd.f32 %v1011, 0.5
  %v1084 = vadd.f32 %v1012, 0.5
  %v1085 = vadd.f32 %v1013, 0.5
  %v1086 = vadd.f32 %v1014, 0.5
  %v1087 = vadd.f32 %v1015, 0.5
  %v1088 = vadd.f32 %v1016, 0.5
  %v1089 = vadd.f32 %v1017, 0.5
  %v1090 = vadd.f32 %v1018, 0.5
  %v1091 = vadd.f32 %v1019, 0.5
  %v1092 = vadd.f32 %v1020, 0.5
  %v1093 = vadd.f32 %v1021, 0.5
  %v1094 = vadd.f32 %v1022, 0.5
  %v1095 = vadd.f32 %v1023, 0.5
  %v1096 = vadd.f32 %v1024, 0.5
  %v1097 = vadd.f32 %v1025, 0.5
  %v1098 = vadd.f32 %v1026, 0.5
  %v1099 = vadd.f32 %v1027, 0.5
  %v1100 = vadd.f32 %v1028, 0.5
  %v1101 = vadd.f32 %v1029, 0.5
  %v1102 = vadd.f32 %v1030, 0.5
  %v1103 = vadd.f32 %v1031, 0.5
  %v1104 = vadd.f32 %v1032, 0.5
  %v1105 = vmax.f32 %v1033, 0.0
  %v1106 = vmax.f32 %v1034, 0.0
  %v1107 = vmax.f32 %v1035, 0.0
  %v1108 = vmax.f32 %v1036, 0.0
  %v1109 = vmax.f32 %v1037, 0.0
  %v1110 = vmax.f32 %v1038, 0.0
  %v1111 = vmax.f32 %v1039, 0.0
  %v1112 = vmax.f32 %v1040, 0.0
  %v1113 = vmax.f32 %v1041, 0.0
  %v1114 = vmax.f32 %v1042, 0.0
  %v1115 = vmax.f32 %v1043, 0.0
  %v1116 = vmax.f32 %v1044, 0.0
  %v1117 = vmax.f32 %v1045, 0.0
  %v1118 = vmax.f32 %v1046, 0.0
  %v1119 = vmax.f32 %v1047, 0.0
  %v1120 = vmax.f32 %v1048, 0.0
  %v1121 = vmax.f32 %v1049, 0.0
  %v1122 = vmax.f32 %v1050, 0.0
  %v1123 = vmax.f32 %v1051, 0.0
  %v1124 = vmax.f32 %v1052, 0.0
  %v1125 = vmax.f32 %v1053, 0.0
  %v1126 = vmax.f32 %v1054, 0.0
  %v1127 = vmax.f32 %v1055, 0.0
  %v1128 = vmax.f32 %v1056, 0.0
  %v1129 = vmax.f32 %v1057, 0.0
  %v1130 = vmax.f32 %v1058, 0.0
  %v1131 = vmax.f32 %v1059, 0.0
  %v1132 = vmax.f32 %v1060, 0.0
  %v1133 = vmax.f32 %v1061, 0.0
  %v1134 = vmax.f32 %v1062, 0.0
  %v1135 = vmax.f32 %v1063, 0.0
  %v1136 = vmax.f32 %v1064, 0.0
  %v1137 = vmax.f32 %v1065, 0.0
  %v1138 = vmax.f32 %v1066, 0.0
  %v1139 = vmax.f32 %v1067, 0.0
  %v1140 = vmax.f32 %v1068, 0.0
  %v1141 = vmax.f32 %v1069, 0.0
  %v1142 = vmax.f32 %v1070, 0.0
  %v1143 = vmax.f32 %v1071, 0.0
  %v1144 = vmax.f32 %v1072, 0.0
  %v1145 = vmax.f32 %v1073, 0.0
  %v1146 = vmax.f32 %v1074, 0.0
  %v1147 = vmax.f32 %v1075, 0.0
  %v1148 = vmax.f32 %v1076, 0.0
  %v1149 = vmax.f32 %v1077, 0.0
  %v1150 = vmax.f32 %v1078, 0.0
  %v1151 = vmax.f32 %v1079, 0.0
  %v1152 = vmax.f32 %v1080, 0.0
  %v1153 = vmax.f32 %v1081, 0.0
  %v1154 = vmax.f32 %v1082, 0.0
  %v1155 = vmax.f32 %v1083, 0.0
  %v1156 = vmax.f32 %v1084, 0.0
  %v1157 = vmax.f32 %v1085, 0.0
  %v1158 = vmax.f32 %v1086, 0.0
  %v1159 = vmax.f32 %v1087, 0.0
  %v1160 = vmax.f32 %v1088, 0.0
  %v1161 = vmax.f32 %v1089, 0.0
  %v1162 = vmax.f32 %v1090, 0.0
  %v1163 = vmax.f32 %v1091, 0.0
  %v1164 = vmax.f32 %v1092, 0.0
  %v1165 = vmax.f32 %v1093, 0.0
  %v1166 = vmax.f32 %v1094, 0.0
  %v1167 = vmax.f32 %v1095, 0.0
  %v1168 = vmax.f32 %v1096, 0.0
  %v1169 = vmax.f32 %v1097, 0.0
  %v1170 = vmax.f32 %v1098, 0.0
  %v1171 = vmax.f32 %v1099, 0.0
  %v1172 = vmax.f32 %v1100, 0.0
  %v1173 = vmax.f32 %v1101, 0.0
  %v1174 = vmax.f32 %v1102, 0.0
  %v1175 = vmax.f32 %v1103, 0.0
  %v1176 = vmax.f32 %v1104, 0.0
  %v1177 = vmin.f32 %v1105, 1.0
  %v1178 = vmin.f32 %v1106, 1.0
  %v1179 = vmin.f32 %v1107, 1.0
  %v1180 = vmin.f32 %v1108, 1.0
  %v1181 = vmin.f32 %v1109, 1.0
  %v1182 = vmin.f32 %v1110, 1.0
  %v1183 = vmin.f32 %v1111, 1.0
  %v1184 = vmin.f32 %v1112, 1.0
  %v1185 = vmin.f32 %v1113, 1.0
  %v1186 = vmin.f32 %v1114, 1.0
  %v1187 = vmin.f32 %v1115, 1.0
  %v1188 = vmin.f32 %v1116, 1.0
  %v1189 = vmin.f32 %v1117, 1.0
  %v1190 = vmin.f32 %v1118, 1.0
  %v1191 = vmin.f32 %v1119, 1.0
  %v1192 = vmin.f32 %v1120, 1.0
  %v1193 = vmin.f32 %v1121, 1.0
  %v1194 = vmin.f32 %v1122, 1.0
  %v1195 = vmin.f32 %v1123, 1.0
  %v1196 = vmin.f32 %v1124, 1.0
  %v1197 = vmin.f32 %v1125, 1.0
  %v1198 = vmin.f32 %v1126, 1.0
  %v1199 = vmin.f32 %v1127, 1.0
  %v1200 = vmin.f32 %v1128, 1.0
  %v1201 = vmin.f32 %v1129, 1.0
  %v1202 = vmin.f32 %v1130, 1.0
  %v1203 = vmin.f32 %v1131, 1.0
  %v1204 = vmin.f32 %v1132, 1.0
  %v1205 = vmin.f32 %v1133, 1.0
  %v1206 = vmin.f32 %v1134, 1.0
  %v1207 = vmin.f32 %v1135, 1.0
  %v1208 = vmin.f32 %v1136, 1.0
  %v1209 = vmin.f32 %v1137, 1.0
  %v1210 = vmin.f32 %v1138, 1.0
  %v1211 = vmin.f32 %v1139, 1.0
  %v1212 = vmin.f32 %v1140, 1.0
  %v1213 = vmin.f32 %v1141, 1.0
  %v1214 = vmin.f32 %v1142, 1.0
  %v1215 = vmin.f32 %v1143, 1.0
  %v1216 = vmin.f32 %v1144, 1.0
  %v1217 = vmin.f32 %v1145, 1.0
  %v1218 = vmin.f32 %v1146, 1.0
  %v1219 = vmin.f32 %v1147, 1.0
  %v1220 = vmin.f32 %v1148, 1.0
  %v1221 = vmin.f32 %v1149, 1.0
  %v1222 = vmin.f32 %v1150, 1.0
  %v1223 = vmin.f32 %v1151, 1.0
  %v1224 = vmin.f32 %v1152, 1.0
  %v1225 = vmin.f32 %v1153, 1.0
  %v1226 = vmin.f32 %v1154, 1.0
  %v1227 = vmin.f32 %v1155, 1.0
  %v1228 = vmin.f32 %v1156, 1.0
  %v1229 = vmin.f32 %v1157, 1.0
  %v1230 = vmin.f32 %v1158, 1.0
  %v1231 = vmin.f32 %v1159, 1.0
  %v1232 = vmin.f32 %v1160, 1.0
  %v1233 = vmin.f32 %v1161, 1.0
  %v1234 = vmin.f32 %v1162, 1.0
  %v1235 = vmin.f32 %v1163, 1.0
  %v1236 = vmin.f32 %v1164, 1.0
  %v1237 = vmin.f32 %v1165, 1.0
  %v1238 = vmin.f32 %v1166, 1.0
  %v1239 = vmin.f32 %v1167, 1.0
  %v1240 = vmin.f32 %v1168, 1.0
  %v1241 = vmin.f32 %v1169, 1.0
  %v1242 = vmin.f32 %v1170, 1.0
  %v1243 = vmin.f32 %v1171, 1.0
  %v1244 = vmin.f32 %v1172, 1.0
  %v1245 = vmin.f32 %v1173, 1.0
  %v1246 = vmin.f32 %v1174, 1.0
  %v1247 = vmin.f32 %v1175, 1.0
  %v1248 = vmin.f32 %v1176, 1.0
  %v1249 = vld [vmem:[%s2] sm:$0xff]
  %v1250 = vld [vmem:[%s2 + $0x8] sm:$0xff]
  %v1251 = vld [vmem:[%s2 + $0x10] sm:$0xff]
  %v1252 = vld [vmem:[%s2 + $0x18] sm:$0xff]
  %v1253 = vld [vmem:[%s2 + $0x20] sm:$0xff]
  %v1254 = vld [vmem:[%s2 + $0x28] sm:$0xff]
  %v1255 = vld [vmem:[%s2 + $0x30] sm:$0xff]
  %v1256 = vld [vmem:[%s2 + $0x38] sm:$0xff]
  %v1257 = vld [vmem:[%s2 + $0x40] sm:$0xff]
  %v1258 = vld [vmem:[%s2 + $0x48] sm:$0xff]
  %v1259 = vld [vmem:[%s2 + $0x50] sm:$0xff]
  %v1260 = vld [vmem:[%s2 + $0x58] sm:$0xff]
  %v1261 = vld [vmem:[%s2 + $0x60] sm:$0xff]
  %v1262 = vld [vmem:[%s2 + $0x68] sm:$0xff]
  %v1263 = vld [vmem:[%s2 + $0x70] sm:$0xff]
  %v1264 = vld [vmem:[%s2 + $0x78] sm:$0xff]
  %v1265 = vld [vmem:[%s2 + $0x80] sm:$0xff]
  %v1266 = vld [vmem:[%s2 + $0x88] sm:$0xff]
  %v1267 = vld [vmem:[%s2 + $0x90] sm:$0xff]
  %v1268 = vld [vmem:[%s2 + $0x98] sm:$0xff]
  %v1269 = vld [vmem:[%s2 + $0xa0] sm:$0xff]
  %v1270 = vld [vmem:[%s2 + $0xa8] sm:$0xff]
  %v1271 = vld [vmem:[%s2 + $0xb0] sm:$0xff]
  %v1272 = vld [vmem:[%s2 + $0xb8] sm:$0xff]
  %v1273 = vld [vmem:[%s2 + $0xc0] sm:$0xff]
  %v1274 = vld [vmem:[%s2 + $0xc8] sm:$0xff]
  %v1275 = vld [vmem:[%s2 + $0xd0] sm:$0xff]
  %v1276 = vld [vmem:[%s2 + $0xd8] sm:$0xff]
  %v1277 = vld [vmem:[%s2 + $0xe0] sm:$0xff]
  %v1278 = vld [vmem:[%s2 + $0xe8] sm:$0xff]
  %v1279 = vld [vmem:[%s2 + $0xf0] sm:$0xff]
  %v1280 = vld [vmem:[%s2 + $0xf8] sm:$0xff]
  %v1281 = vld [vmem:[%s2 + $0x100] sm:$0xff]
  %v1282 = vld [vmem:[%s2 + $0x108] sm:$0xff]
  %v1283 = vld [vmem:[%s2 + $0x110] sm:$0xff]
  %v1284 = vld [vmem:[%s2 + $0x118] sm:$0xff]
  %v1285 = vld [vmem:[%s2 + $0x120] sm:$0xff]
  %v1286 = vld [vmem:[%s2 + $0x128] sm:$0xff]
  %v1287 = vld [vmem:[%s2 + $0x130] sm:$0xff]
  %v1288 = vld [vmem:[%s2 + $0x138] sm:$0xff]
  %v1289 = vld [vmem:[%s2 + $0x140] sm:$0xff]
  %v1290 = vld [vmem:[%s2 + $0x148] sm:$0xff]
  %v1291 = vld [vmem:[%s2 + $0x150] sm:$0xff]
  %v1292 = vld [vmem:[%s2 + $0x158] sm:$0xff]
  %v1293 = vld [vmem:[%s2 + $0x160] sm:$0xff]
  %v1294 = vld [vmem:[%s2 + $0x168] sm:$0xff]
  %v1295 = vld [vmem:[%s2 + $0x170] sm:$0xff]
  %v1296 = vld [vmem:[%s2 + $0x178] sm:$0xff]
  %v1297 = vld [vmem:[%s2 + $0x180] sm:$0xff]
  %v1298 = vld [vmem:[%s2 + $0x188] sm:$0xff]
  %v1299 = vld [vmem:[%s2 + $0x190] sm:$0xff]
  %v1300 = vld [vmem:[%s2 + $0x198] sm:$0xff]
  %v1301 = vld [vmem:[%s2 + $0x1a0] sm:$0xff]
  %v1302 = vld [vmem:[%s2 + $0x1a8] sm:$0xff]
  %v1303 = vld [vmem:[%s2 + $0x1b0] sm:$0xff]
  %v1304 = vld [vmem:[%s2 + $0x1b8] sm:$0xff]
  %v1305 = vld [vmem:[%s2 + $0x1c0] sm:$0xff]
  %v1306 = vld [vmem:[%s2 + $0x1c8] sm:$0xff]
  %v1307 = vld [vmem:[%s2 + $0x1d0] sm:$0xff]
  %v1308 = vld [vmem:[%s2 + $0x1d8] sm:$0xff]
  %v1309 = vld [vmem:[%s2 + $0x1e0] sm:$0xff]
  %v1310 = vld [vmem:[%s2 + $0x1e8] sm:$0xff]
  %v1311 = vld [vmem:[%s2 + $0x1f0] sm:$0xff]
  %v1312 = vld [vmem:[%s2 + $0x1f8] sm:$0xff]
  %v1313 = vld [vmem:[%s2 + $0x200] sm:$0xff]
  %v1314 = vld [vmem:[%s2 + $0x208] sm:$0xff]
  %v1315 = vld [vmem:[%s2 + $0x210] sm:$0xff]
  %v1316 = vld [vmem:[%s2 + $0x218] sm:$0xff]
  %v1317 = vld [vmem:[%s2 + $0x220] sm:$0xff]
  %v1318 = vld [vmem:[%s2 + $0x228] sm:$0xff]
  %v1319 = vld [vmem:[%s2 + $0x230] sm:$0xff]
  %v1320 = vld [vmem:[%s2 + $0x238] sm:$0xff]
  %1322 = vset.pattern.permute.xlu0 0
  %1323 = vperm.xlu0 %1322, %v1177
  %v1324 = vpop.permute.xlu0 %1323
  %1327 = vset.pattern.permute.xlu0 0
  %1328 = vperm.xlu0 %1327, %v1178
  %v1329 = vpop.permute.xlu0 %1328
  %1332 = vset.pattern.permute.xlu0 0
  %1333 = vperm.xlu0 %1332, %v1179
  %v1334 = vpop.permute.xlu0 %1333
  %1337 = vset.pattern.permute.xlu0 0
  %1338 = vperm.xlu0 %1337, %v1180
  %v1339 = vpop.permute.xlu0 %1338
  %1342 = vset.pattern.permute.xlu0 0
  %1343 = vperm.xlu0 %1342, %v1181
  %v1344 = vpop.permute.xlu0 %1343
  %1347 = vset.pattern.permute.xlu0 0
  %1348 = vperm.xlu0 %1347, %v1182
  %v1349 = vpop.permute.xlu0 %1348
  %1352 = vset.pattern.permute.xlu0 0
  %1353 = vperm.xlu0 %1352, %v1183
  %v1354 = vpop.permute.xlu0 %1353
  %1357 = vset.pattern.permute.xlu0 0
  %1358 = vperm.xlu0 %1357, %v1184
  %v1359 = vpop.permute.xlu0 %1358
  %1362 = vset.pattern.permute.xlu0 0
  %1363 = vperm.xlu0 %1362, %v1185
  %v1364 = vpop.permute.xlu0 %1363
  %1367 = vset.pattern.permute.xlu0 0
  %1368 = vperm.xlu0 %1367, %v1186
  %v1369 = vpop.permute.xlu0 %1368
  %1372 = vset.pattern.permute.xlu0 0
  %1373 = vperm.xlu0 %1372, %v1187
  %v1374 = vpop.permute.xlu0 %1373
  %1377 = vset.pattern.permute.xlu0 0
  %1378 = vperm.xlu0 %1377, %v1188
  %v1379 = vpop.permute.xlu0 %1378
  %1382 = vset.pattern.permute.xlu0 0
  %1383 = vperm.xlu0 %1382, %v1189
  %v1384 = vpop.permute.xlu0 %1383
  %1387 = vset.pattern.permute.xlu0 0
  %1388 = vperm.xlu0 %1387, %v1190
  %v1389 = vpop.permute.xlu0 %1388
  %1392 = vset.pattern.permute.xlu0 0
  %1393 = vperm.xlu0 %1392, %v1191
  %v1394 = vpop.permute.xlu0 %1393
  %1397 = vset.pattern.permute.xlu0 0
  %1398 = vperm.xlu0 %1397, %v1192
  %v1399 = vpop.permute.xlu0 %1398
  %1402 = vset.pattern.permute.xlu0 0
  %1403 = vperm.xlu0 %1402, %v1193
  %v1404 = vpop.permute.xlu0 %1403
  %1407 = vset.pattern.permute.xlu0 0
  %1408 = vperm.xlu0 %1407, %v1194
  %v1409 = vpop.permute.xlu0 %1408
  %1412 = vset.pattern.permute.xlu0 0
  %1413 = vperm.xlu0 %1412, %v1195
  %v1414 = vpop.permute.xlu0 %1413
  %1417 = vset.pattern.permute.xlu0 0
  %1418 = vperm.xlu0 %1417, %v1196
  %v1419 = vpop.permute.xlu0 %1418
  %1422 = vset.pattern.permute.xlu0 0
  %1423 = vperm.xlu0 %1422, %v1197
  %v1424 = vpop.permute.xlu0 %1423
  %1427 = vset.pattern.permute.xlu0 0
  %1428 = vperm.xlu0 %1427, %v1198
  %v1429 = vpop.permute.xlu0 %1428
  %1432 = vset.pattern.permute.xlu0 0
  %1433 = vperm.xlu0 %1432, %v1199
  %v1434 = vpop.permute.xlu0 %1433
  %1437 = vset.pattern.permute.xlu0 0
  %1438 = vperm.xlu0 %1437, %v1200
  %v1439 = vpop.permute.xlu0 %1438
  %1442 = vset.pattern.permute.xlu0 0
  %1443 = vperm.xlu0 %1442, %v1201
  %v1444 = vpop.permute.xlu0 %1443
  %1447 = vset.pattern.permute.xlu0 0
  %1448 = vperm.xlu0 %1447, %v1202
  %v1449 = vpop.permute.xlu0 %1448
  %1452 = vset.pattern.permute.xlu0 0
  %1453 = vperm.xlu0 %1452, %v1203
  %v1454 = vpop.permute.xlu0 %1453
  %1457 = vset.pattern.permute.xlu0 0
  %1458 = vperm.xlu0 %1457, %v1204
  %v1459 = vpop.permute.xlu0 %1458
  %1462 = vset.pattern.permute.xlu0 0
  %1463 = vperm.xlu0 %1462, %v1205
  %v1464 = vpop.permute.xlu0 %1463
  %1467 = vset.pattern.permute.xlu0 0
  %1468 = vperm.xlu0 %1467, %v1206
  %v1469 = vpop.permute.xlu0 %1468
  %1472 = vset.pattern.permute.xlu0 0
  %1473 = vperm.xlu0 %1472, %v1207
  %v1474 = vpop.permute.xlu0 %1473
  %1477 = vset.pattern.permute.xlu0 0
  %1478 = vperm.xlu0 %1477, %v1208
  %v1479 = vpop.permute.xlu0 %1478
  %1482 = vset.pattern.permute.xlu0 0
  %1483 = vperm.xlu0 %1482, %v1209
  %v1484 = vpop.permute.xlu0 %1483
  %1487 = vset.pattern.permute.xlu0 0
  %1488 = vperm.xlu0 %1487, %v1210
  %v1489 = vpop.permute.xlu0 %1488
  %1492 = vset.pattern.permute.xlu0 0
  %1493 = vperm.xlu0 %1492, %v1211
  %v1494 = vpop.permute.xlu0 %1493
  %1497 = vset.pattern.permute.xlu0 0
  %1498 = vperm.xlu0 %1497, %v1212
  %v1499 = vpop.permute.xlu0 %1498
  %1502 = vset.pattern.permute.xlu0 0
  %1503 = vperm.xlu0 %1502, %v1213
  %v1504 = vpop.permute.xlu0 %1503
  %1507 = vset.pattern.permute.xlu0 0
  %1508 = vperm.xlu0 %1507, %v1214
  %v1509 = vpop.permute.xlu0 %1508
  %1512 = vset.pattern.permute.xlu0 0
  %1513 = vperm.xlu0 %1512, %v1215
  %v1514 = vpop.permute.xlu0 %1513
  %1517 = vset.pattern.permute.xlu0 0
  %1518 = vperm.xlu0 %1517, %v1216
  %v1519 = vpop.permute.xlu0 %1518
  %1522 = vset.pattern.permute.xlu0 0
  %1523 = vperm.xlu0 %1522, %v1217
  %v1524 = vpop.permute.xlu0 %1523
  %1527 = vset.pattern.permute.xlu0 0
  %1528 = vperm.xlu0 %1527, %v1218
  %v1529 = vpop.permute.xlu0 %1528
  %1532 = vset.pattern.permute.xlu0 0
  %1533 = vperm.xlu0 %1532, %v1219
  %v1534 = vpop.permute.xlu0 %1533
  %1537 = vset.pattern.permute.xlu0 0
  %1538 = vperm.xlu0 %1537, %v1220
  %v1539 = vpop.permute.xlu0 %1538
  %1542 = vset.pattern.permute.xlu0 0
  %1543 = vperm.xlu0 %1542, %v1221
  %v1544 = vpop.permute.xlu0 %1543
  %1547 = vset.pattern.permute.xlu0 0
  %1548 = vperm.xlu0 %1547, %v1222
  %v1549 = vpop.permute.xlu0 %1548
  %1552 = vset.pattern.permute.xlu0 0
  %1553 = vperm.xlu0 %1552, %v1223
  %v1554 = vpop.permute.xlu0 %1553
  %1557 = vset.pattern.permute.xlu0 0
  %1558 = vperm.xlu0 %1557, %v1224
  %v1559 = vpop.permute.xlu0 %1558
  %1562 = vset.pattern.permute.xlu0 0
  %1563 = vperm.xlu0 %1562, %v1225
  %v1564 = vpop.permute.xlu0 %1563
  %1567 = vset.pattern.permute.xlu0 0
  %1568 = vperm.xlu0 %1567, %v1226
  %v1569 = vpop.permute.xlu0 %1568
  %1572 = vset.pattern.permute.xlu0 0
  %1573 = vperm.xlu0 %1572, %v1227
  %v1574 = vpop.permute.xlu0 %1573
  %1577 = vset.pattern.permute.xlu0 0
  %1578 = vperm.xlu0 %1577, %v1228
  %v1579 = vpop.permute.xlu0 %1578
  %1582 = vset.pattern.permute.xlu0 0
  %1583 = vperm.xlu0 %1582, %v1229
  %v1584 = vpop.permute.xlu0 %1583
  %1587 = vset.pattern.permute.xlu0 0
  %1588 = vperm.xlu0 %1587, %v1230
  %v1589 = vpop.permute.xlu0 %1588
  %1592 = vset.pattern.permute.xlu0 0
  %1593 = vperm.xlu0 %1592, %v1231
  %v1594 = vpop.permute.xlu0 %1593
  %1597 = vset.pattern.permute.xlu0 0
  %1598 = vperm.xlu0 %1597, %v1232
  %v1599 = vpop.permute.xlu0 %1598
  %1602 = vset.pattern.permute.xlu0 0
  %1603 = vperm.xlu0 %1602, %v1233
  %v1604 = vpop.permute.xlu0 %1603
  %1607 = vset.pattern.permute.xlu0 0
  %1608 = vperm.xlu0 %1607, %v1234
  %v1609 = vpop.permute.xlu0 %1608
  %1612 = vset.pattern.permute.xlu0 0
  %1613 = vperm.xlu0 %1612, %v1235
  %v1614 = vpop.permute.xlu0 %1613
  %1617 = vset.pattern.permute.xlu0 0
  %1618 = vperm.xlu0 %1617, %v1236
  %v1619 = vpop.permute.xlu0 %1618
  %1622 = vset.pattern.permute.xlu0 0
  %1623 = vperm.xlu0 %1622, %v1237
  %v1624 = vpop.permute.xlu0 %1623
  %1627 = vset.pattern.permute.xlu0 0
  %1628 = vperm.xlu0 %1627, %v1238
  %v1629 = vpop.permute.xlu0 %1628
  %1632 = vset.pattern.permute.xlu0 0
  %1633 = vperm.xlu0 %1632, %v1239
  %v1634 = vpop.permute.xlu0 %1633
  %1637 = vset.pattern.permute.xlu0 0
  %1638 = vperm.xlu0 %1637, %v1240
  %v1639 = vpop.permute.xlu0 %1638
  %1642 = vset.pattern.permute.xlu0 0
  %1643 = vperm.xlu0 %1642, %v1241
  %v1644 = vpop.permute.xlu0 %1643
  %1647 = vset.pattern.permute.xlu0 0
  %1648 = vperm.xlu0 %1647, %v1242
  %v1649 = vpop.permute.xlu0 %1648
  %1652 = vset.pattern.permute.xlu0 0
  %1653 = vperm.xlu0 %1652, %v1243
  %v1654 = vpop.permute.xlu0 %1653
  %1657 = vset.pattern.permute.xlu0 0
  %1658 = vperm.xlu0 %1657, %v1244
  %v1659 = vpop.permute.xlu0 %1658
  %1662 = vset.pattern.permute.xlu0 0
  %1663 = vperm.xlu0 %1662, %v1245
  %v1664 = vpop.permute.xlu0 %1663
  %1667 = vset.pattern.permute.xlu0 0
  %1668 = vperm.xlu0 %1667, %v1246
  %v1669 = vpop.permute.xlu0 %1668
  %1672 = vset.pattern.permute.xlu0 0
  %1673 = vperm.xlu0 %1672, %v1247
  %v1674 = vpop.permute.xlu0 %1673
  %1677 = vset.pattern.permute.xlu0 0
  %1678 = vperm.xlu0 %1677, %v1248
  %v1679 = vpop.permute.xlu0 %1678
  %v1681 = vmul.f32 %v1249, %v1324
  %v1682 = vmul.f32 %v1250, %v1329
  %v1683 = vmul.f32 %v1251, %v1334
  %v1684 = vmul.f32 %v1252, %v1339
  %v1685 = vmul.f32 %v1253, %v1344
  %v1686 = vmul.f32 %v1254, %v1349
  %v1687 = vmul.f32 %v1255, %v1354
  %v1688 = vmul.f32 %v1256, %v1359
  %v1689 = vmul.f32 %v1257, %v1364
  %v1690 = vmul.f32 %v1258, %v1369
  %v1691 = vmul.f32 %v1259, %v1374
  %v1692 = vmul.f32 %v1260, %v1379
  %v1693 = vmul.f32 %v1261, %v1384
  %v1694 = vmul.f32 %v1262, %v1389
  %v1695 = vmul.f32 %v1263, %v1394
  %v1696 = vmul.f32 %v1264, %v1399
  %v1697 = vmul.f32 %v1265, %v1404
  %v1698 = vmul.f32 %v1266, %v1409
  %v1699 = vmul.f32 %v1267, %v1414
  %v1700 = vmul.f32 %v1268, %v1419
  %v1701 = vmul.f32 %v1269, %v1424
  %v1702 = vmul.f32 %v1270, %v1429
  %v1703 = vmul.f32 %v1271, %v1434
  %v1704 = vmul.f32 %v1272, %v1439
  %v1705 = vmul.f32 %v1273, %v1444
  %v1706 = vmul.f32 %v1274, %v1449
  %v1707 = vmul.f32 %v1275, %v1454
  %v1708 = vmul.f32 %v1276, %v1459
  %v1709 = vmul.f32 %v1277, %v1464
  %v1710 = vmul.f32 %v1278, %v1469
  %v1711 = vmul.f32 %v1279, %v1474
  %v1712 = vmul.f32 %v1280, %v1479
  %v1713 = vmul.f32 %v1281, %v1484
  %v1714 = vmul.f32 %v1282, %v1489
  %v1715 = vmul.f32 %v1283, %v1494
  %v1716 = vmul.f32 %v1284, %v1499
  %v1717 = vmul.f32 %v1285, %v1504
  %v1718 = vmul.f32 %v1286, %v1509
  %v1719 = vmul.f32 %v1287, %v1514
  %v1720 = vmul.f32 %v1288, %v1519
  %v1721 = vmul.f32 %v1289, %v1524
  %v1722 = vmul.f32 %v1290, %v1529
  %v1723 = vmul.f32 %v1291, %v1534
  %v1724 = vmul.f32 %v1292, %v1539
  %v1725 = vmul.f32 %v1293, %v1544
  %v1726 = vmul.f32 %v1294, %v1549
  %v1727 = vmul.f32 %v1295, %v1554
  %v1728 = vmul.f32 %v1296, %v1559
  %v1729 = vmul.f32 %v1297, %v1564
  %v1730 = vmul.f32 %v1298, %v1569
  %v1731 = vmul.f32 %v1299, %v1574
  %v1732 = vmul.f32 %v1300, %v1579
  %v1733 = vmul.f32 %v1301, %v1584
  %v1734 = vmul.f32 %v1302, %v1589
  %v1735 = vmul.f32 %v1303, %v1594
  %v1736 = vmul.f32 %v1304, %v1599
  %v1737 = vmul.f32 %v1305, %v1604
  %v1738 = vmul.f32 %v1306, %v1609
  %v1739 = vmul.f32 %v1307, %v1614
  %v1740 = vmul.f32 %v1308, %v1619
  %v1741 = vmul.f32 %v1309, %v1624
  %v1742 = vmul.f32 %v1310, %v1629
  %v1743 = vmul.f32 %v1311, %v1634
  %v1744 = vmul.f32 %v1312, %v1639
  %v1745 = vmul.f32 %v1313, %v1644
  %v1746 = vmul.f32 %v1314, %v1649
  %v1747 = vmul.f32 %v1315, %v1654
  %v1748 = vmul.f32 %v1316, %v1659
  %v1749 = vmul.f32 %v1317, %v1664
  %v1750 = vmul.f32 %v1318, %v1669
  %v1751 = vmul.f32 %v1319, %v1674
  %v1752 = vmul.f32 %v1320, %v1679
  %v1753 = vld [vmem:[%s3] sm:$0xff]
  %v1754 = vld [vmem:[%s3 + $0x8] sm:$0xff]
  %v1755 = vld [vmem:[%s3 + $0x10] sm:$0xff]
  %v1756 = vld [vmem:[%s3 + $0x18] sm:$0xff]
  %v1757 = vld [vmem:[%s3 + $0x20] sm:$0xff]
  %v1758 = vld [vmem:[%s3 + $0x28] sm:$0xff]
  %v1759 = vld [vmem:[%s3 + $0x30] sm:$0xff]
  %v1760 = vld [vmem:[%s3 + $0x38] sm:$0xff]
  %v1761 = vld [vmem:[%s3 + $0x40] sm:$0xff]
  %v1762 = vld [vmem:[%s3 + $0x48] sm:$0xff]
  %v1763 = vld [vmem:[%s3 + $0x50] sm:$0xff]
  %v1764 = vld [vmem:[%s3 + $0x58] sm:$0xff]
  %v1765 = vld [vmem:[%s3 + $0x60] sm:$0xff]
  %v1766 = vld [vmem:[%s3 + $0x68] sm:$0xff]
  %v1767 = vld [vmem:[%s3 + $0x70] sm:$0xff]
  %v1768 = vld [vmem:[%s3 + $0x78] sm:$0xff]
  %v1769 = vld [vmem:[%s3 + $0x80] sm:$0xff]
  %v1770 = vld [vmem:[%s3 + $0x88] sm:$0xff]
  %v1771 = vld [vmem:[%s3 + $0x90] sm:$0xff]
  %v1772 = vld [vmem:[%s3 + $0x98] sm:$0xff]
  %v1773 = vld [vmem:[%s3 + $0xa0] sm:$0xff]
  %v1774 = vld [vmem:[%s3 + $0xa8] sm:$0xff]
  %v1775 = vld [vmem:[%s3 + $0xb0] sm:$0xff]
  %v1776 = vld [vmem:[%s3 + $0xb8] sm:$0xff]
  %v1777 = vld [vmem:[%s3 + $0xc0] sm:$0xff]
  %v1778 = vld [vmem:[%s3 + $0xc8] sm:$0xff]
  %v1779 = vld [vmem:[%s3 + $0xd0] sm:$0xff]
  %v1780 = vld [vmem:[%s3 + $0xd8] sm:$0xff]
  %v1781 = vld [vmem:[%s3 + $0xe0] sm:$0xff]
  %v1782 = vld [vmem:[%s3 + $0xe8] sm:$0xff]
  %v1783 = vld [vmem:[%s3 + $0xf0] sm:$0xff]
  %v1784 = vld [vmem:[%s3 + $0xf8] sm:$0xff]
  %v1785 = vld [vmem:[%s3 + $0x100] sm:$0xff]
  %v1786 = vld [vmem:[%s3 + $0x108] sm:$0xff]
  %v1787 = vld [vmem:[%s3 + $0x110] sm:$0xff]
  %v1788 = vld [vmem:[%s3 + $0x118] sm:$0xff]
  %v1789 = vld [vmem:[%s3 + $0x120] sm:$0xff]
  %v1790 = vld [vmem:[%s3 + $0x128] sm:$0xff]
  %v1791 = vld [vmem:[%s3 + $0x130] sm:$0xff]
  %v1792 = vld [vmem:[%s3 + $0x138] sm:$0xff]
  %v1793 = vld [vmem:[%s3 + $0x140] sm:$0xff]
  %v1794 = vld [vmem:[%s3 + $0x148] sm:$0xff]
  %v1795 = vld [vmem:[%s3 + $0x150] sm:$0xff]
  %v1796 = vld [vmem:[%s3 + $0x158] sm:$0xff]
  %v1797 = vld [vmem:[%s3 + $0x160] sm:$0xff]
  %v1798 = vld [vmem:[%s3 + $0x168] sm:$0xff]
  %v1799 = vld [vmem:[%s3 + $0x170] sm:$0xff]
  %v1800 = vld [vmem:[%s3 + $0x178] sm:$0xff]
  %v1801 = vld [vmem:[%s3 + $0x180] sm:$0xff]
  %v1802 = vld [vmem:[%s3 + $0x188] sm:$0xff]
  %v1803 = vld [vmem:[%s3 + $0x190] sm:$0xff]
  %v1804 = vld [vmem:[%s3 + $0x198] sm:$0xff]
  %v1805 = vld [vmem:[%s3 + $0x1a0] sm:$0xff]
  %v1806 = vld [vmem:[%s3 + $0x1a8] sm:$0xff]
  %v1807 = vld [vmem:[%s3 + $0x1b0] sm:$0xff]
  %v1808 = vld [vmem:[%s3 + $0x1b8] sm:$0xff]
  %v1809 = vld [vmem:[%s3 + $0x1c0] sm:$0xff]
  %v1810 = vld [vmem:[%s3 + $0x1c8] sm:$0xff]
  %v1811 = vld [vmem:[%s3 + $0x1d0] sm:$0xff]
  %v1812 = vld [vmem:[%s3 + $0x1d8] sm:$0xff]
  %vm1813 = vcmask 523264
  %v1815 = vsel %vm1813, %v1757, 0
  %v1818 = vsel %vm1813, %v1762, 0
  %v1821 = vsel %vm1813, %v1767, 0
  %v1824 = vsel %vm1813, %v1772, 0
  %v1827 = vsel %vm1813, %v1777, 0
  %v1830 = vsel %vm1813, %v1782, 0
  %v1833 = vsel %vm1813, %v1787, 0
  %v1836 = vsel %vm1813, %v1792, 0
  %v1839 = vsel %vm1813, %v1797, 0
  %v1842 = vsel %vm1813, %v1802, 0
  %v1845 = vsel %vm1813, %v1807, 0
  %v1848 = vsel %vm1813, %v1812, 0
  %1850 = vmatpush.msra.mxu0 %v1696
  %1851 = vmatpush.msra.mxu0 %v1695
  %1852 = vmatpush.msra.mxu0 %v1694
  %1853 = vmatpush.msra.mxu0 %v1693
  %1854 = vmatpush.msra.mxu0 %v1692
  %1855 = vmatpush.msra.mxu0 %v1691
  %1856 = vmatpush.msra.mxu0 %v1690
  %1857 = vmatpush.msra.mxu0 %v1689
  %1858 = vmatpush.msra.mxu0 %v1688
  %1859 = vmatpush.msra.mxu0 %v1687
  %1860 = vmatpush.msra.mxu0 %v1686
  %1861 = vmatpush.msra.mxu0 %v1685
  %1862 = vmatpush.msra.mxu0 %v1684
  %1863 = vmatpush.msra.mxu0 %v1683
  %1864 = vmatpush.msra.mxu0 %v1682
  %1865 = vmatpush.msra.mxu0 %v1681
  %1866 = vmatmul.f32.gmra.mxu0 %v1753
  %v1867 = vpop.f32.mrf.mxu0
  %v1868 = vadd.f32 0.0, %v1867
  %1869 = vmatmul.f32.gmra.mxu0 %v1758
  %v1870 = vpop.f32.mrf.mxu0
  %v1871 = vadd.f32 0.0, %v1870
  %1872 = vmatmul.f32.gmra.mxu0 %v1763
  %v1873 = vpop.f32.mrf.mxu0
  %v1874 = vadd.f32 0.0, %v1873
  %1875 = vmatmul.f32.gmra.mxu0 %v1768
  %v1876 = vpop.f32.mrf.mxu0
  %v1877 = vadd.f32 0.0, %v1876
  %1878 = vmatmul.f32.gmra.mxu0 %v1773
  %v1879 = vpop.f32.mrf.mxu0
  %v1880 = vadd.f32 0.0, %v1879
  %1881 = vmatmul.f32.gmra.mxu0 %v1778
  %v1882 = vpop.f32.mrf.mxu0
  %v1883 = vadd.f32 0.0, %v1882
  %1884 = vmatmul.f32.gmra.mxu0 %v1783
  %v1885 = vpop.f32.mrf.mxu0
  %v1886 = vadd.f32 0.0, %v1885
  %1887 = vmatmul.f32.gmra.mxu0 %v1788
  %v1888 = vpop.f32.mrf.mxu0
  %v1889 = vadd.f32 0.0, %v1888
  %1890 = vmatmul.f32.gmra.mxu0 %v1793
  %v1891 = vpop.f32.mrf.mxu0
  %v1892 = vadd.f32 0.0, %v1891
  %1893 = vmatmul.f32.gmra.mxu0 %v1798
  %v1894 = vpop.f32.mrf.mxu0
  %v1895 = vadd.f32 0.0, %v1894
  %1896 = vmatmul.f32.gmra.mxu0 %v1803
  %v1897 = vpop.f32.mrf.mxu0
  %v1898 = vadd.f32 0.0, %v1897
  %1899 = vmatmul.f32.gmra.mxu0 %v1808
  %v1900 = vpop.f32.mrf.mxu0
  %v1901 = vadd.f32 0.0, %v1900
  %1902 = vdwg.mxu0
  %1903 = vmatpush.msra.mxu0 %v1712
  %1904 = vmatpush.msra.mxu0 %v1711
  %1905 = vmatpush.msra.mxu0 %v1710
  %1906 = vmatpush.msra.mxu0 %v1709
  %1907 = vmatpush.msra.mxu0 %v1708
  %1908 = vmatpush.msra.mxu0 %v1707
  %1909 = vmatpush.msra.mxu0 %v1706
  %1910 = vmatpush.msra.mxu0 %v1705
  %1911 = vmatpush.msra.mxu0 %v1704
  %1912 = vmatpush.msra.mxu0 %v1703
  %1913 = vmatpush.msra.mxu0 %v1702
  %1914 = vmatpush.msra.mxu0 %v1701
  %1915 = vmatpush.msra.mxu0 %v1700
  %1916 = vmatpush.msra.mxu0 %v1699
  %1917 = vmatpush.msra.mxu0 %v1698
  %1918 = vmatpush.msra.mxu0 %v1697
  %1919 = vmatmul.f32.gmra.mxu0 %v1754
  %v1920 = vpop.f32.mrf.mxu0
  %v1921 = vadd.f32 %v1868, %v1920
  %1922 = vmatmul.f32.gmra.mxu0 %v1759
  %v1923 = vpop.f32.mrf.mxu0
  %v1924 = vadd.f32 %v1871, %v1923
  %1925 = vmatmul.f32.gmra.mxu0 %v1764
  %v1926 = vpop.f32.mrf.mxu0
  %v1927 = vadd.f32 %v1874, %v1926
  %1928 = vmatmul.f32.gmra.mxu0 %v1769
  %v1929 = vpop.f32.mrf.mxu0
  %v1930 = vadd.f32 %v1877, %v1929
  %1931 = vmatmul.f32.gmra.mxu0 %v1774
  %v1932 = vpop.f32.mrf.mxu0
  %v1933 = vadd.f32 %v1880, %v1932
  %1934 = vmatmul.f32.gmra.mxu0 %v1779
  %v1935 = vpop.f32.mrf.mxu0
  %v1936 = vadd.f32 %v1883, %v1935
  %1937 = vmatmul.f32.gmra.mxu0 %v1784
  %v1938 = vpop.f32.mrf.mxu0
  %v1939 = vadd.f32 %v1886, %v1938
  %1940 = vmatmul.f32.gmra.mxu0 %v1789
  %v1941 = vpop.f32.mrf.mxu0
  %v1942 = vadd.f32 %v1889, %v1941
  %1943 = vmatmul.f32.gmra.mxu0 %v1794
  %v1944 = vpop.f32.mrf.mxu0
  %v1945 = vadd.f32 %v1892, %v1944
  %1946 = vmatmul.f32.gmra.mxu0 %v1799
  %v1947 = vpop.f32.mrf.mxu0
  %v1948 = vadd.f32 %v1895, %v1947
  %1949 = vmatmul.f32.gmra.mxu0 %v1804
  %v1950 = vpop.f32.mrf.mxu0
  %v1951 = vadd.f32 %v1898, %v1950
  %1952 = vmatmul.f32.gmra.mxu0 %v1809
  %v1953 = vpop.f32.mrf.mxu0
  %v1954 = vadd.f32 %v1901, %v1953
  %1955 = vdwg.mxu0
  %1956 = vmatpush.msra.mxu0 %v1728
  %1957 = vmatpush.msra.mxu0 %v1727
  %1958 = vmatpush.msra.mxu0 %v1726
  %1959 = vmatpush.msra.mxu0 %v1725
  %1960 = vmatpush.msra.mxu0 %v1724
  %1961 = vmatpush.msra.mxu0 %v1723
  %1962 = vmatpush.msra.mxu0 %v1722
  %1963 = vmatpush.msra.mxu0 %v1721
  %1964 = vmatpush.msra.mxu0 %v1720
  %1965 = vmatpush.msra.mxu0 %v1719
  %1966 = vmatpush.msra.mxu0 %v1718
  %1967 = vmatpush.msra.mxu0 %v1717
  %1968 = vmatpush.msra.mxu0 %v1716
  %1969 = vmatpush.msra.mxu0 %v1715
  %1970 = vmatpush.msra.mxu0 %v1714
  %1971 = vmatpush.msra.mxu0 %v1713
  %1972 = vmatmul.f32.gmra.mxu0 %v1755
  %v1973 = vpop.f32.mrf.mxu0
  %v1974 = vadd.f32 %v1921, %v1973
  %1975 = vmatmul.f32.gmra.mxu0 %v1760
  %v1976 = vpop.f32.mrf.mxu0
  %v1977 = vadd.f32 %v1924, %v1976
  %1978 = vmatmul.f32.gmra.mxu0 %v1765
  %v1979 = vpop.f32.mrf.mxu0
  %v1980 = vadd.f32 %v1927, %v1979
  %1981 = vmatmul.f32.gmra.mxu0 %v1770
  %v1982 = vpop.f32.mrf.mxu0
  %v1983 = vadd.f32 %v1930, %v1982
  %1984 = vmatmul.f32.gmra.mxu0 %v1775
  %v1985 = vpop.f32.mrf.mxu0
  %v1986 = vadd.f32 %v1933, %v1985
  %1987 = vmatmul.f32.gmra.mxu0 %v1780
  %v1988 = vpop.f32.mrf.mxu0
  %v1989 = vadd.f32 %v1936, %v1988
  %1990 = vmatmul.f32.gmra.mxu0 %v1785
  %v1991 = vpop.f32.mrf.mxu0
  %v1992 = vadd.f32 %v1939, %v1991
  %1993 = vmatmul.f32.gmra.mxu0 %v1790
  %v1994 = vpop.f32.mrf.mxu0
  %v1995 = vadd.f32 %v1942, %v1994
  %1996 = vmatmul.f32.gmra.mxu0 %v1795
  %v1997 = vpop.f32.mrf.mxu0
  %v1998 = vadd.f32 %v1945, %v1997
  %1999 = vmatmul.f32.gmra.mxu0 %v1800
  %v2000 = vpop.f32.mrf.mxu0
  %v2001 = vadd.f32 %v1948, %v2000
  %2002 = vmatmul.f32.gmra.mxu0 %v1805
  %v2003 = vpop.f32.mrf.mxu0
  %v2004 = vadd.f32 %v1951, %v2003
  %2005 = vmatmul.f32.gmra.mxu0 %v1810
  %v2006 = vpop.f32.mrf.mxu0
  %v2007 = vadd.f32 %v1954, %v2006
  %2008 = vdwg.mxu0
  %2009 = vmatpush.msra.mxu0 %v1744
  %2010 = vmatpush.msra.mxu0 %v1743
  %2011 = vmatpush.msra.mxu0 %v1742
  %2012 = vmatpush.msra.mxu0 %v1741
  %2013 = vmatpush.msra.mxu0 %v1740
  %2014 = vmatpush.msra.mxu0 %v1739
  %2015 = vmatpush.msra.mxu0 %v1738
  %2016 = vmatpush.msra.mxu0 %v1737
  %2017 = vmatpush.msra.mxu0 %v1736
  %2018 = vmatpush.msra.mxu0 %v1735
  %2019 = vmatpush.msra.mxu0 %v1734
  %2020 = vmatpush.msra.mxu0 %v1733
  %2021 = vmatpush.msra.mxu0 %v1732
  %2022 = vmatpush.msra.mxu0 %v1731
  %2023 = vmatpush.msra.mxu0 %v1730
  %2024 = vmatpush.msra.mxu0 %v1729
  %2025 = vmatmul.f32.gmra.mxu0 %v1756
  %v2026 = vpop.f32.mrf.mxu0
  %v2027 = vadd.f32 %v1974, %v2026
  %2028 = vmatmul.f32.gmra.mxu0 %v1761
  %v2029 = vpop.f32.mrf.mxu0
  %v2030 = vadd.f32 %v1977, %v2029
  %2031 = vmatmul.f32.gmra.mxu0 %v1766
  %v2032 = vpop.f32.mrf.mxu0
  %v2033 = vadd.f32 %v1980, %v2032
  %2034 = vmatmul.f32.gmra.mxu0 %v1771
  %v2035 = vpop.f32.mrf.mxu0
  %v2036 = vadd.f32 %v1983, %v2035
  %2037 = vmatmul.f32.gmra.mxu0 %v1776
  %v2038 = vpop.f32.mrf.mxu0
  %v2039 = vadd.f32 %v1986, %v2038
  %2040 = vmatmul.f32.gmra.mxu0 %v1781
  %v2041 = vpop.f32.mrf.mxu0
  %v2042 = vadd.f32 %v1989, %v2041
  %2043 = vmatmul.f32.gmra.mxu0 %v1786
  %v2044 = vpop.f32.mrf.mxu0
  %v2045 = vadd.f32 %v1992, %v2044
  %2046 = vmatmul.f32.gmra.mxu0 %v1791
  %v2047 = vpop.f32.mrf.mxu0
  %v2048 = vadd.f32 %v1995, %v2047
  %2049 = vmatmul.f32.gmra.mxu0 %v1796
  %v2050 = vpop.f32.mrf.mxu0
  %v2051 = vadd.f32 %v1998, %v2050
  %2052 = vmatmul.f32.gmra.mxu0 %v1801
  %v2053 = vpop.f32.mrf.mxu0
  %v2054 = vadd.f32 %v2001, %v2053
  %2055 = vmatmul.f32.gmra.mxu0 %v1806
  %v2056 = vpop.f32.mrf.mxu0
  %v2057 = vadd.f32 %v2004, %v2056
  %2058 = vmatmul.f32.gmra.mxu0 %v1811
  %v2059 = vpop.f32.mrf.mxu0
  %v2060 = vadd.f32 %v2007, %v2059
  %2061 = vdwg.mxu0
  %2062 = vmatpush.msra.mxu0 0.0
  %2063 = vmatpush.msra.mxu0 0.0
  %2064 = vmatpush.msra.mxu0 0.0
  %2065 = vmatpush.msra.mxu0 0.0
  %2066 = vmatpush.msra.mxu0 0.0
  %2067 = vmatpush.msra.mxu0 0.0
  %2068 = vmatpush.msra.mxu0 0.0
  %2069 = vmatpush.msra.mxu0 0.0
  %2070 = vmatpush.msra.mxu0 %v1752
  %2071 = vmatpush.msra.mxu0 %v1751
  %2072 = vmatpush.msra.mxu0 %v1750
  %2073 = vmatpush.msra.mxu0 %v1749
  %2074 = vmatpush.msra.mxu0 %v1748
  %2075 = vmatpush.msra.mxu0 %v1747
  %2076 = vmatpush.msra.mxu0 %v1746
  %2077 = vmatpush.msra.mxu0 %v1745
  %2078 = vmatmul.f32.gmra.mxu0 %v1815
  %v2079 = vpop.f32.mrf.mxu0
  %v2080 = vadd.f32 %v2027, %v2079
  %2081 = vmatmul.f32.gmra.mxu0 %v1818
  %v2082 = vpop.f32.mrf.mxu0
  %v2083 = vadd.f32 %v2030, %v2082
  %2084 = vmatmul.f32.gmra.mxu0 %v1821
  %v2085 = vpop.f32.mrf.mxu0
  %v2086 = vadd.f32 %v2033, %v2085
  %2087 = vmatmul.f32.gmra.mxu0 %v1824
  %v2088 = vpop.f32.mrf.mxu0
  %v2089 = vadd.f32 %v2036, %v2088
  %2090 = vmatmul.f32.gmra.mxu0 %v1827
  %v2091 = vpop.f32.mrf.mxu0
  %v2092 = vadd.f32 %v2039, %v2091
  %2093 = vmatmul.f32.gmra.mxu0 %v1830
  %v2094 = vpop.f32.mrf.mxu0
  %v2095 = vadd.f32 %v2042, %v2094
  %2096 = vmatmul.f32.gmra.mxu0 %v1833
  %v2097 = vpop.f32.mrf.mxu0
  %v2098 = vadd.f32 %v2045, %v2097
  %2099 = vmatmul.f32.gmra.mxu0 %v1836
  %v2100 = vpop.f32.mrf.mxu0
  %v2101 = vadd.f32 %v2048, %v2100
  %2102 = vmatmul.f32.gmra.mxu0 %v1839
  %v2103 = vpop.f32.mrf.mxu0
  %v2104 = vadd.f32 %v2051, %v2103
  %2105 = vmatmul.f32.gmra.mxu0 %v1842
  %v2106 = vpop.f32.mrf.mxu0
  %v2107 = vadd.f32 %v2054, %v2106
  %2108 = vmatmul.f32.gmra.mxu0 %v1845
  %v2109 = vpop.f32.mrf.mxu0
  %v2110 = vadd.f32 %v2057, %v2109
  %2111 = vmatmul.f32.gmra.mxu0 %v1848
  %v2112 = vpop.f32.mrf.mxu0
  %v2113 = vadd.f32 %v2060, %v2112
  %2114 = vdwg.mxu0
  %vm2115 = vcmask 400384
  %v2116 = vsel %vm2115, %v2080, 0.0
  %2117 = vadd.xlane.f32.xlu0 %v2116
  %v2118 = vpop.xlane.xlu0 %2117
  %v2119 = vsel %vm2115, %v2083, 0.0
  %2120 = vadd.xlane.f32.xlu0 %v2119
  %v2121 = vpop.xlane.xlu0 %2120
  %v2122 = vsel %vm2115, %v2086, 0.0
  %2123 = vadd.xlane.f32.xlu0 %v2122
  %v2124 = vpop.xlane.xlu0 %2123
  %v2125 = vsel %vm2115, %v2089, 0.0
  %2126 = vadd.xlane.f32.xlu0 %v2125
  %v2127 = vpop.xlane.xlu0 %2126
  %v2128 = vsel %vm2115, %v2092, 0.0
  %2129 = vadd.xlane.f32.xlu0 %v2128
  %v2130 = vpop.xlane.xlu0 %2129
  %v2131 = vsel %vm2115, %v2095, 0.0
  %2132 = vadd.xlane.f32.xlu0 %v2131
  %v2133 = vpop.xlane.xlu0 %2132
  %v2134 = vsel %vm2115, %v2098, 0.0
  %2135 = vadd.xlane.f32.xlu0 %v2134
  %v2136 = vpop.xlane.xlu0 %2135
  %v2137 = vsel %vm2115, %v2101, 0.0
  %2138 = vadd.xlane.f32.xlu0 %v2137
  %v2139 = vpop.xlane.xlu0 %2138
  %v2140 = vsel %vm2115, %v2104, 0.0
  %2141 = vadd.xlane.f32.xlu0 %v2140
  %v2142 = vpop.xlane.xlu0 %2141
  %v2143 = vsel %vm2115, %v2107, 0.0
  %2144 = vadd.xlane.f32.xlu0 %v2143
  %v2145 = vpop.xlane.xlu0 %2144
  %v2146 = vsel %vm2115, %v2110, 0.0
  %2147 = vadd.xlane.f32.xlu0 %v2146
  %v2148 = vpop.xlane.xlu0 %2147
  %v2149 = vsel %vm2115, %v2113, 0.0
  %2150 = vadd.xlane.f32.xlu0 %v2149
  %v2151 = vpop.xlane.xlu0 %2150
  %v2152 = vmul.f32 %v2118, 0.020408163
  %v2153 = vmul.f32 %v2121, 0.020408163
  %v2154 = vmul.f32 %v2124, 0.020408163
  %v2155 = vmul.f32 %v2127, 0.020408163
  %v2156 = vmul.f32 %v2130, 0.020408163
  %v2157 = vmul.f32 %v2133, 0.020408163
  %v2158 = vmul.f32 %v2136, 0.020408163
  %v2159 = vmul.f32 %v2139, 0.020408163
  %v2160 = vmul.f32 %v2142, 0.020408163
  %v2161 = vmul.f32 %v2145, 0.020408163
  %v2162 = vmul.f32 %v2148, 0.020408163
  %v2163 = vmul.f32 %v2151, 0.020408163
  %v2164 = vmul.f32 %v2080, %v2080
  %v2165 = vmul.f32 %v2083, %v2083
  %v2166 = vmul.f32 %v2086, %v2086
  %v2167 = vmul.f32 %v2089, %v2089
  %v2168 = vmul.f32 %v2092, %v2092
  %v2169 = vmul.f32 %v2095, %v2095
  %v2170 = vmul.f32 %v2098, %v2098
  %v2171 = vmul.f32 %v2101, %v2101
  %v2172 = vmul.f32 %v2104, %v2104
  %v2173 = vmul.f32 %v2107, %v2107
  %v2174 = vmul.f32 %v2110, %v2110
  %v2175 = vmul.f32 %v2113, %v2113
  %v2176 = vsel %vm2115, %v2164, 0.0
  %2177 = vadd.xlane.f32.xlu0 %v2176
  %v2178 = vpop.xlane.xlu0 %2177
  %v2179 = vsel %vm2115, %v2165, 0.0
  %2180 = vadd.xlane.f32.xlu0 %v2179
  %v2181 = vpop.xlane.xlu0 %2180
  %v2182 = vsel %vm2115, %v2166, 0.0
  %2183 = vadd.xlane.f32.xlu0 %v2182
  %v2184 = vpop.xlane.xlu0 %2183
  %v2185 = vsel %vm2115, %v2167, 0.0
  %2186 = vadd.xlane.f32.xlu0 %v2185
  %v2187 = vpop.xlane.xlu0 %2186
  %v2188 = vsel %vm2115, %v2168, 0.0
  %2189 = vadd.xlane.f32.xlu0 %v2188
  %v2190 = vpop.xlane.xlu0 %2189
  %v2191 = vsel %vm2115, %v2169, 0.0
  %2192 = vadd.xlane.f32.xlu0 %v2191
  %v2193 = vpop.xlane.xlu0 %2192
  %v2194 = vsel %vm2115, %v2170, 0.0
  %2195 = vadd.xlane.f32.xlu0 %v2194
  %v2196 = vpop.xlane.xlu0 %2195
  %v2197 = vsel %vm2115, %v2171, 0.0
  %2198 = vadd.xlane.f32.xlu0 %v2197
  %v2199 = vpop.xlane.xlu0 %2198
  %v2200 = vsel %vm2115, %v2172, 0.0
  %2201 = vadd.xlane.f32.xlu0 %v2200
  %v2202 = vpop.xlane.xlu0 %2201
  %v2203 = vsel %vm2115, %v2173, 0.0
  %2204 = vadd.xlane.f32.xlu0 %v2203
  %v2205 = vpop.xlane.xlu0 %2204
  %v2206 = vsel %vm2115, %v2174, 0.0
  %2207 = vadd.xlane.f32.xlu0 %v2206
  %v2208 = vpop.xlane.xlu0 %2207
  %v2209 = vsel %vm2115, %v2175, 0.0
  %2210 = vadd.xlane.f32.xlu0 %v2209
  %v2211 = vpop.xlane.xlu0 %2210
  %v2212 = vmul.f32 %v2178, 0.020408163
  %v2213 = vmul.f32 %v2181, 0.020408163
  %v2214 = vmul.f32 %v2184, 0.020408163
  %v2215 = vmul.f32 %v2187, 0.020408163
  %v2216 = vmul.f32 %v2190, 0.020408163
  %v2217 = vmul.f32 %v2193, 0.020408163
  %v2218 = vmul.f32 %v2196, 0.020408163
  %v2219 = vmul.f32 %v2199, 0.020408163
  %v2220 = vmul.f32 %v2202, 0.020408163
  %v2221 = vmul.f32 %v2205, 0.020408163
  %v2222 = vmul.f32 %v2208, 0.020408163
  %v2223 = vmul.f32 %v2211, 0.020408163
  %v2224 = vmul.f32 %v2152, %v2152
  %v2225 = vmul.f32 %v2153, %v2153
  %v2226 = vmul.f32 %v2154, %v2154
  %v2227 = vmul.f32 %v2155, %v2155
  %v2228 = vmul.f32 %v2156, %v2156
  %v2229 = vmul.f32 %v2157, %v2157
  %v2230 = vmul.f32 %v2158, %v2158
  %v2231 = vmul.f32 %v2159, %v2159
  %v2232 = vmul.f32 %v2160, %v2160
  %v2233 = vmul.f32 %v2161, %v2161
  %v2234 = vmul.f32 %v2162, %v2162
  %v2235 = vmul.f32 %v2163, %v2163
  %v2236 = vsub.f32 %v2212, %v2224
  %v2237 = vsub.f32 %v2213, %v2225
  %v2238 = vsub.f32 %v2214, %v2226
  %v2239 = vsub.f32 %v2215, %v2227
  %v2240 = vsub.f32 %v2216, %v2228
  %v2241 = vsub.f32 %v2217, %v2229
  %v2242 = vsub.f32 %v2218, %v2230
  %v2243 = vsub.f32 %v2219, %v2231
  %v2244 = vsub.f32 %v2220, %v2232
  %v2245 = vsub.f32 %v2221, %v2233
  %v2246 = vsub.f32 %v2222, %v2234
  %v2247 = vsub.f32 %v2223, %v2235
  %v2248 = vadd.f32 %v2236, 0.001
  %v2249 = vadd.f32 %v2237, 0.001
  %v2250 = vadd.f32 %v2238, 0.001
  %v2251 = vadd.f32 %v2239, 0.001
  %v2252 = vadd.f32 %v2240, 0.001
  %v2253 = vadd.f32 %v2241, 0.001
  %v2254 = vadd.f32 %v2242, 0.001
  %v2255 = vadd.f32 %v2243, 0.001
  %v2256 = vadd.f32 %v2244, 0.001
  %v2257 = vadd.f32 %v2245, 0.001
  %v2258 = vadd.f32 %v2246, 0.001
  %v2259 = vadd.f32 %v2247, 0.001
  %v2260 = vrsqrt.pop %v2248
  %v2261 = vmul.f32 %v2260, %v2248
  %v2262 = vmul.f32 %v2261, %v2260
  %v2263 = vmul.f32 0.5, %v2262
  %v2264 = vsub.f32 1.5, %v2263
  %v2265 = vmul.f32 %v2260, %v2264
  %vm2266 = vweird.f32 %v2248
  %vm2267 = vweird.f32 %v2260
  %vm2268 = vmor %vm2266, %vm2267
  %v2269 = vsel %vm2268, %v2260, %v2265
  %v2270 = vrsqrt.pop %v2249
  %v2271 = vmul.f32 %v2270, %v2249
  %v2272 = vmul.f32 %v2271, %v2270
  %v2273 = vmul.f32 0.5, %v2272
  %v2274 = vsub.f32 1.5, %v2273
  %v2275 = vmul.f32 %v2270, %v2274
  %vm2276 = vweird.f32 %v2249
  %vm2277 = vweird.f32 %v2270
  %vm2278 = vmor %vm2276, %vm2277
  %v2279 = vsel %vm2278, %v2270, %v2275
  %v2280 = vrsqrt.pop %v2250
  %v2281 = vmul.f32 %v2280, %v2250
  %v2282 = vmul.f32 %v2281, %v2280
  %v2283 = vmul.f32 0.5, %v2282
  %v2284 = vsub.f32 1.5, %v2283
  %v2285 = vmul.f32 %v2280, %v2284
  %vm2286 = vweird.f32 %v2250
  %vm2287 = vweird.f32 %v2280
  %vm2288 = vmor %vm2286, %vm2287
  %v2289 = vsel %vm2288, %v2280, %v2285
  %v2290 = vrsqrt.pop %v2251
  %v2291 = vmul.f32 %v2290, %v2251
  %v2292 = vmul.f32 %v2291, %v2290
  %v2293 = vmul.f32 0.5, %v2292
  %v2294 = vsub.f32 1.5, %v2293
  %v2295 = vmul.f32 %v2290, %v2294
  %vm2296 = vweird.f32 %v2251
  %vm2297 = vweird.f32 %v2290
  %vm2298 = vmor %vm2296, %vm2297
  %v2299 = vsel %vm2298, %v2290, %v2295
  %v2300 = vrsqrt.pop %v2252
  %v2301 = vmul.f32 %v2300, %v2252
  %v2302 = vmul.f32 %v2301, %v2300
  %v2303 = vmul.f32 0.5, %v2302
  %v2304 = vsub.f32 1.5, %v2303
  %v2305 = vmul.f32 %v2300, %v2304
  %vm2306 = vweird.f32 %v2252
  %vm2307 = vweird.f32 %v2300
  %vm2308 = vmor %vm2306, %vm2307
  %v2309 = vsel %vm2308, %v2300, %v2305
  %v2310 = vrsqrt.pop %v2253
  %v2311 = vmul.f32 %v2310, %v2253
  %v2312 = vmul.f32 %v2311, %v2310
  %v2313 = vmul.f32 0.5, %v2312
  %v2314 = vsub.f32 1.5, %v2313
  %v2315 = vmul.f32 %v2310, %v2314
  %vm2316 = vweird.f32 %v2253
  %vm2317 = vweird.f32 %v2310
  %vm2318 = vmor %vm2316, %vm2317
  %v2319 = vsel %vm2318, %v2310, %v2315
  %v2320 = vrsqrt.pop %v2254
  %v2321 = vmul.f32 %v2320, %v2254
  %v2322 = vmul.f32 %v2321, %v2320
  %v2323 = vmul.f32 0.5, %v2322
  %v2324 = vsub.f32 1.5, %v2323
  %v2325 = vmul.f32 %v2320, %v2324
  %vm2326 = vweird.f32 %v2254
  %vm2327 = vweird.f32 %v2320
  %vm2328 = vmor %vm2326, %vm2327
  %v2329 = vsel %vm2328, %v2320, %v2325
  %v2330 = vrsqrt.pop %v2255
  %v2331 = vmul.f32 %v2330, %v2255
  %v2332 = vmul.f32 %v2331, %v2330
  %v2333 = vmul.f32 0.5, %v2332
  %v2334 = vsub.f32 1.5, %v2333
  %v2335 = vmul.f32 %v2330, %v2334
  %vm2336 = vweird.f32 %v2255
  %vm2337 = vweird.f32 %v2330
  %vm2338 = vmor %vm2336, %vm2337
  %v2339 = vsel %vm2338, %v2330, %v2335
  %v2340 = vrsqrt.pop %v2256
  %v2341 = vmul.f32 %v2340, %v2256
  %v2342 = vmul.f32 %v2341, %v2340
  %v2343 = vmul.f32 0.5, %v2342
  %v2344 = vsub.f32 1.5, %v2343
  %v2345 = vmul.f32 %v2340, %v2344
  %vm2346 = vweird.f32 %v2256
  %vm2347 = vweird.f32 %v2340
  %vm2348 = vmor %vm2346, %vm2347
  %v2349 = vsel %vm2348, %v2340, %v2345
  %v2350 = vrsqrt.pop %v2257
  %v2351 = vmul.f32 %v2350, %v2257
  %v2352 = vmul.f32 %v2351, %v2350
  %v2353 = vmul.f32 0.5, %v2352
  %v2354 = vsub.f32 1.5, %v2353
  %v2355 = vmul.f32 %v2350, %v2354
  %vm2356 = vweird.f32 %v2257
  %vm2357 = vweird.f32 %v2350
  %vm2358 = vmor %vm2356, %vm2357
  %v2359 = vsel %vm2358, %v2350, %v2355
  %v2360 = vrsqrt.pop %v2258
  %v2361 = vmul.f32 %v2360, %v2258
  %v2362 = vmul.f32 %v2361, %v2360
  %v2363 = vmul.f32 0.5, %v2362
  %v2364 = vsub.f32 1.5, %v2363
  %v2365 = vmul.f32 %v2360, %v2364
  %vm2366 = vweird.f32 %v2258
  %vm2367 = vweird.f32 %v2360
  %vm2368 = vmor %vm2366, %vm2367
  %v2369 = vsel %vm2368, %v2360, %v2365
  %v2370 = vrsqrt.pop %v2259
  %v2371 = vmul.f32 %v2370, %v2259
  %v2372 = vmul.f32 %v2371, %v2370
  %v2373 = vmul.f32 0.5, %v2372
  %v2374 = vsub.f32 1.5, %v2373
  %v2375 = vmul.f32 %v2370, %v2374
  %vm2376 = vweird.f32 %v2259
  %vm2377 = vweird.f32 %v2370
  %vm2378 = vmor %vm2376, %vm2377
  %v2379 = vsel %vm2378, %v2370, %v2375
  %v2380 = vmul.f32 %v2269, %v92
  %v2381 = vmul.f32 %v2279, %v93
  %v2382 = vmul.f32 %v2289, %v94
  %v2383 = vmul.f32 %v2299, %v95
  %v2384 = vmul.f32 %v2309, %v96
  %v2385 = vmul.f32 %v2319, %v97
  %v2386 = vmul.f32 %v2329, %v98
  %v2387 = vmul.f32 %v2339, %v99
  %v2388 = vmul.f32 %v2349, %v100
  %v2389 = vmul.f32 %v2359, %v101
  %v2390 = vmul.f32 %v2369, %v102
  %v2391 = vmul.f32 %v2379, %v103
  %v2392 = vsub.f32 %v2080, %v2152
  %v2393 = vsub.f32 %v2083, %v2153
  %v2394 = vsub.f32 %v2086, %v2154
  %v2395 = vsub.f32 %v2089, %v2155
  %v2396 = vsub.f32 %v2092, %v2156
  %v2397 = vsub.f32 %v2095, %v2157
  %v2398 = vsub.f32 %v2098, %v2158
  %v2399 = vsub.f32 %v2101, %v2159
  %v2400 = vsub.f32 %v2104, %v2160
  %v2401 = vsub.f32 %v2107, %v2161
  %v2402 = vsub.f32 %v2110, %v2162
  %v2403 = vsub.f32 %v2113, %v2163
  %2405 = vset.pattern.permute.xlu0 0
  %2406 = vperm.xlu0 %2405, %v2380
  %v2407 = vpop.permute.xlu0 %2406
  %2410 = vset.pattern.permute.xlu0 0
  %2411 = vperm.xlu0 %2410, %v2381
  %v2412 = vpop.permute.xlu0 %2411
  %2415 = vset.pattern.permute.xlu0 0
  %2416 = vperm.xlu0 %2415, %v2382
  %v2417 = vpop.permute.xlu0 %2416
  %2420 = vset.pattern.permute.xlu0 0
  %2421 = vperm.xlu0 %2420, %v2383
  %v2422 = vpop.permute.xlu0 %2421
  %2425 = vset.pattern.permute.xlu0 0
  %2426 = vperm.xlu0 %2425, %v2384
  %v2427 = vpop.permute.xlu0 %2426
  %2430 = vset.pattern.permute.xlu0 0
  %2431 = vperm.xlu0 %2430, %v2385
  %v2432 = vpop.permute.xlu0 %2431
  %2435 = vset.pattern.permute.xlu0 0
  %2436 = vperm.xlu0 %2435, %v2386
  %v2437 = vpop.permute.xlu0 %2436
  %2440 = vset.pattern.permute.xlu0 0
  %2441 = vperm.xlu0 %2440, %v2387
  %v2442 = vpop.permute.xlu0 %2441
  %2445 = vset.pattern.permute.xlu0 0
  %2446 = vperm.xlu0 %2445, %v2388
  %v2447 = vpop.permute.xlu0 %2446
  %2450 = vset.pattern.permute.xlu0 0
  %2451 = vperm.xlu0 %2450, %v2389
  %v2452 = vpop.permute.xlu0 %2451
  %2455 = vset.pattern.permute.xlu0 0
  %2456 = vperm.xlu0 %2455, %v2390
  %v2457 = vpop.permute.xlu0 %2456
  %2460 = vset.pattern.permute.xlu0 0
  %2461 = vperm.xlu0 %2460, %v2391
  %v2462 = vpop.permute.xlu0 %2461
  %v2464 = vmul.f32 %v2392, %v2407
  %v2465 = vmul.f32 %v2393, %v2412
  %v2466 = vmul.f32 %v2394, %v2417
  %v2467 = vmul.f32 %v2395, %v2422
  %v2468 = vmul.f32 %v2396, %v2427
  %v2469 = vmul.f32 %v2397, %v2432
  %v2470 = vmul.f32 %v2398, %v2437
  %v2471 = vmul.f32 %v2399, %v2442
  %v2472 = vmul.f32 %v2400, %v2447
  %v2473 = vmul.f32 %v2401, %v2452
  %v2474 = vmul.f32 %v2402, %v2457
  %v2475 = vmul.f32 %v2403, %v2462
  %2477 = vset.pattern.permute.xlu0 0
  %2478 = vperm.xlu0 %2477, %v104
  %v2479 = vpop.permute.xlu0 %2478
  %2482 = vset.pattern.permute.xlu0 0
  %2483 = vperm.xlu0 %2482, %v105
  %v2484 = vpop.permute.xlu0 %2483
  %2487 = vset.pattern.permute.xlu0 0
  %2488 = vperm.xlu0 %2487, %v106
  %v2489 = vpop.permute.xlu0 %2488
  %2492 = vset.pattern.permute.xlu0 0
  %2493 = vperm.xlu0 %2492, %v107
  %v2494 = vpop.permute.xlu0 %2493
  %2497 = vset.pattern.permute.xlu0 0
  %2498 = vperm.xlu0 %2497, %v108
  %v2499 = vpop.permute.xlu0 %2498
  %2502 = vset.pattern.permute.xlu0 0
  %2503 = vperm.xlu0 %2502, %v109
  %v2504 = vpop.permute.xlu0 %2503
  %2507 = vset.pattern.permute.xlu0 0
  %2508 = vperm.xlu0 %2507, %v110
  %v2509 = vpop.permute.xlu0 %2508
  %2512 = vset.pattern.permute.xlu0 0
  %2513 = vperm.xlu0 %2512, %v111
  %v2514 = vpop.permute.xlu0 %2513
  %2517 = vset.pattern.permute.xlu0 0
  %2518 = vperm.xlu0 %2517, %v112
  %v2519 = vpop.permute.xlu0 %2518
  %2522 = vset.pattern.permute.xlu0 0
  %2523 = vperm.xlu0 %2522, %v113
  %v2524 = vpop.permute.xlu0 %2523
  %2527 = vset.pattern.permute.xlu0 0
  %2528 = vperm.xlu0 %2527, %v114
  %v2529 = vpop.permute.xlu0 %2528
  %2532 = vset.pattern.permute.xlu0 0
  %2533 = vperm.xlu0 %2532, %v115
  %v2534 = vpop.permute.xlu0 %2533
  %v2536 = vadd.f32 %v2464, %v2479
  %v2537 = vadd.f32 %v2465, %v2484
  %v2538 = vadd.f32 %v2466, %v2489
  %v2539 = vadd.f32 %v2467, %v2494
  %v2540 = vadd.f32 %v2468, %v2499
  %v2541 = vadd.f32 %v2469, %v2504
  %v2542 = vadd.f32 %v2470, %v2509
  %v2543 = vadd.f32 %v2471, %v2514
  %v2544 = vadd.f32 %v2472, %v2519
  %v2545 = vadd.f32 %v2473, %v2524
  %v2546 = vadd.f32 %v2474, %v2529
  %v2547 = vadd.f32 %v2475, %v2534
  %2548 = vst.msk [vmem:[%s5] sm:$0xff] %vm2115, %v2536
  %2549 = vst.msk [vmem:[%s5 + $0x8] sm:$0xff] %vm2115, %v2537
  %2550 = vst.msk [vmem:[%s5 + $0x10] sm:$0xff] %vm2115, %v2538
  %2551 = vst.msk [vmem:[%s5 + $0x18] sm:$0xff] %vm2115, %v2539
  %2552 = vst.msk [vmem:[%s5 + $0x20] sm:$0xff] %vm2115, %v2540
  %2553 = vst.msk [vmem:[%s5 + $0x28] sm:$0xff] %vm2115, %v2541
  %2554 = vst.msk [vmem:[%s5 + $0x30] sm:$0xff] %vm2115, %v2542
  %2555 = vst.msk [vmem:[%s5 + $0x38] sm:$0xff] %vm2115, %v2543
  %2556 = vst.msk [vmem:[%s5 + $0x40] sm:$0xff] %vm2115, %v2544
  %2557 = vst.msk [vmem:[%s5 + $0x48] sm:$0xff] %vm2115, %v2545
  %2558 = vst.msk [vmem:[%s5 + $0x50] sm:$0xff] %vm2115, %v2546
  %2559 = vst.msk [vmem:[%s5 + $0x58] sm:$0xff] %vm2115, %v2547
  // Predicated region
  $region22: #{tpu_custom_call.1} parent=0 // pred_check
    _
  $region23: #{tpu_custom_call.1} parent=0 // pred_check_branch
    %2561 = sbr.rel (0) target = $region25
  $region24: #{tpu_custom_call.1} parent=0 // pred_region
    _
  $region25: #{tpu_custom_call.1} parent=0 // pred_fallthru
    _
  // Predicated region
  $region26: #{tpu_custom_call.1} parent=0 // pred_check
    _
  $region27: #{tpu_custom_call.1} parent=0 // pred_check_branch
    %2563 = sbr.rel (0) target = $region29
  $region28: #{tpu_custom_call.1} parent=0 // pred_region
    _
  $region29: #{tpu_custom_call.1} parent=0 // pred_fallthru
    _

</llo_original>
